<compile_context>
chip_gen: v5e
topology: v5e:2x2
jax: 0.10.0
libtpu: 0.0.40
codegen_flags: <defaults>
</compile_context>

<pallas_src>
import jax
import jax.numpy as jnp
import numpy as np
from jax.experimental import pallas as pl
from jax.experimental.pallas import tpu as pltpu

# MXU operand dtype: bf16 on all generations (f32 accumulation via preferred_element_type,
# f32 elementwise gate / softmax math).
MXU_DTYPE = jnp.bfloat16

# Scoped VMEM limit: safe on v5e/v6e (128 MiB physical) and v7x (64 MiB physical).
_VMEM_LIMIT_BYTES = 48 * 1024 * 1024
# Per-tile working-set target used when sizing the batch tile (leaves pipeline headroom).
_TILE_BUDGET_BYTES = 28 * 1024 * 1024


def _round_up(x, m):
    return (x + m - 1) // m * m


# ----------------------------------------------------------------------------
# T-aware batch-tile sizing (review item: budget must include T, not gcd(Bp, 128))
# ----------------------------------------------------------------------------
def _tile_vmem_bytes(bt, T, D, H, C, L, E):
    f32, bf16 = 4, 2
    x_blk = 2 * T * bt * D * f32                  # time-major input block, double-buffered
    ctx_blk = 2 * bt * C * L * E * f32            # context-token block, double-buffered
    out_blk = 2 * bt * T * (H + E) * f32          # batch-major output block, double-buffered
    gates = T * bt * 4 * H * f32                  # fused hoisted input-projection scratch
    enc = T * bt * H * f32                        # time-major hidden-state scratch
    carries = 2 * bt * H * f32                    # h, c
    epilog = bt * T * (2 * H + E + 3 * C) * f32 + bt * C * E * f32   # transient epilogue values
    weights = 2 * (D * 4 * H + H * 4 * H) * bf16 + 4 * H * f32
    return x_blk + ctx_blk + out_blk + gates + enc + carries + epilog + weights


def _choose_batch_tiling(B, T, D, H, C, L, E):
    Bp8 = max(8, _round_up(B, 8))
    bt = 8
    # largest multiple of 8 (<=128, <= padded batch) whose working set fits the budget
    while bt < min(128, Bp8) and _tile_vmem_bytes(bt + 8, T, D, H, C, L, E) <= _TILE_BUDGET_BYTES:
        bt += 8
    # keep >= 2 "parallel" batch tiles when the batch allows it (v7x has 2 TensorCores)
    if Bp8 >= 16:
        bt = min(bt, max(8, (Bp8 // 2) // 8 * 8))
    Bp = _round_up(Bp8, bt)
    return bt, Bp


# ----------------------------------------------------------------------------
# Fused kernel: LSTM recurrence + context mean-pool + dot-product attention
#               + softmax + weighted sum + concat   (one batch tile per grid step)
# ----------------------------------------------------------------------------
def _lstm_attn_kernel(x_ref, wih_ref, whh_ref, b_ref, ctx_ref, out_ref,
                      gx_scr, enc_scr, h_scr, c_scr):
    # x_ref:   (T, Bt, D)      time-major word embeddings (f32; cast to bf16 at the MXU)
    # wih_ref: (D, 4H)         fused input projection, gate order i, f, g, o (bf16)
    # whh_ref: (H, 4H)         fused recurrent projection (bf16)
    # b_ref:   (1, 4H)         pre-summed bias (b_ih + b_hh), f32
    # ctx_ref: (Bt, C, L, E)   context token embeddings for this batch tile
    # out_ref: (Bt, T, H+E)    batch-major concat([encoding, attn_values], -1)
    # gx_scr:  (T, Bt, 4H)     hoisted, fused input-gate projections
    # enc_scr: (T, Bt, H)      time-major hidden states
    # h_scr/c_scr: (Bt, H)     recurrent carries
    T, Bt, D = x_ref.shape
    H = h_scr.shape[-1]
    H4 = whh_ref.shape[-1]
    C, L, E = ctx_ref.shape[1:]

    # ---- Hoisted input projection: ONE (T*Bt, D) x (D, 4H) bf16 matmul, outside the
    # ---- serial recurrence; lane-dense 4H-wide gate scratch (no 64-lane masked stores).
    x_flat = x_ref[...].reshape(T * Bt, D).astype(wih_ref.dtype)
    gx = jnp.dot(x_flat, wih_ref[...], preferred_element_type=jnp.float32) + b_ref[...]
    gx_scr[...] = gx.reshape(T, Bt, H4)

    h_scr[...] = jnp.zeros_like(h_scr)
    c_scr[...] = jnp.zeros_like(c_scr)

    w_hh = whh_ref[...]   # (H, 4H) bf16, loaded once

    def sigmoid1(z):
        # exact identity; a single EUP transcendental instead of exp + reciprocal
        return 0.5 * jnp.tanh(0.5 * z) + 0.5

    def step(t, carry):
        h = h_scr[...]
        c = c_scr[...]
        # One fused (Bt, H) x (H, 4H) matmul per timestep (was 4 separate N=64 pushes).
        g = gx_scr[t] + jnp.dot(h.astype(w_hh.dtype), w_hh,
                                preferred_element_type=jnp.float32)      # (Bt, 4H) f32
        i_g = sigmoid1(g[:, 0 * H:1 * H])
        f_g = sigmoid1(g[:, 1 * H:2 * H])
        g_g = jnp.tanh(g[:, 2 * H:3 * H])
        o_g = sigmoid1(g[:, 3 * H:4 * H])
        c_new = f_g * c + i_g * g_g
        h_new = o_g * jnp.tanh(c_new)
        c_scr[...] = c_new
        h_scr[...] = h_new
        enc_scr[t] = h_new
        return carry

    # Bounded unroll: full only for short sequences, otherwise a small factor so the
    # LLO scheduler overlaps adjacent steps without blowing up vreg live ranges.
    unroll = T if T <= 16 else 8
    jax.lax.fori_loop(0, T, step, 0, unroll=unroll)

    # ---- Fused attention epilogue (hidden states are already in VMEM) --------------
    enc_bm = pltpu.einshape("tbh->bth", enc_scr[...])                    # (Bt, T, H) f32

    # context_embedder + torch.mean(embedding, dim=1): mean over the L context tokens.
    ctx = jnp.sum(ctx_ref[...], axis=2) * (1.0 / L)                      # (Bt, C, E) f32

    # Unscaled dot-product attention of each timestep's query over the C context lines
    # (requires E == H), max-subtracted softmax with an EUP approximate reciprocal.
    scores = jnp.einsum("bth,bch->btc",
                        enc_bm.astype(MXU_DTYPE), ctx.astype(MXU_DTYPE),
                        preferred_element_type=jnp.float32)              # (Bt, T, C)
    scores = scores - jnp.max(scores, axis=-1, keepdims=True)
    p = jnp.exp(scores)
    attn = p * pl.reciprocal(jnp.sum(p, axis=-1, keepdims=True), approx=True)

    # torch.bmm(attn, context_embedding): attention-weighted context values.
    values = jnp.einsum("btc,bce->bte",
                        attn.astype(MXU_DTYPE), ctx.astype(MXU_DTYPE),
                        preferred_element_type=jnp.float32)              # (Bt, T, E)

    # torch.cat([encoding, final_encoding], dim=2): build in-register, ONE full-width
    # (lane-dense when H+E == 128) batch-major store.
    out_ref[...] = jnp.concatenate([enc_bm, values], axis=-1).astype(out_ref.dtype)


def fused_lstm_attn(x_tm, w_ih, w_hh, bias, ctx_tok, *, b_tile):
    """x_tm: (T, Bp, D) time-major f32; ctx_tok: (Bp, C, L, E) -> (Bp, T, H+E) batch-major."""
    T, Bp, D = x_tm.shape
    H4 = w_hh.shape[-1]
    H = H4 // 4
    _, C, L, E = ctx_tok.shape
    assert Bp % b_tile == 0 and b_tile % 8 == 0

    grid = (Bp // b_tile,)
    kernel = pl.pallas_call(
        _lstm_attn_kernel,
        out_shape=jax.ShapeDtypeStruct((Bp, T, H + E), jnp.float32),
        grid=grid,
        in_specs=[
            pl.BlockSpec((T, b_tile, D), lambda i: (0, i, 0)),
            pl.BlockSpec((D, H4), lambda i: (0, 0)),
            pl.BlockSpec((H, H4), lambda i: (0, 0)),
            pl.BlockSpec((1, H4), lambda i: (0, 0)),
            pl.BlockSpec((b_tile, C, L, E), lambda i: (i, 0, 0, 0)),
        ],
        out_specs=pl.BlockSpec((b_tile, T, H + E), lambda i: (i, 0, 0)),
        scratch_shapes=[
            pltpu.VMEM((T, b_tile, H4), jnp.float32),   # fused input-gate projections
            pltpu.VMEM((T, b_tile, H), jnp.float32),    # time-major hidden states
            pltpu.VMEM((b_tile, H), jnp.float32),       # h carry
            pltpu.VMEM((b_tile, H), jnp.float32),       # c carry
        ],
        compiler_params=pltpu.CompilerParams(
            dimension_semantics=("parallel",),          # batch tiles are independent
            vmem_limit_bytes=_VMEM_LIMIT_BYTES,
        ),
    )
    return kernel(x_tm, w_ih.astype(MXU_DTYPE), w_hh.astype(MXU_DTYPE),
                  bias.astype(jnp.float32), ctx_tok)


# ----------------------------------------------------------------------------
# Module wrapper (glue: embedding gathers, batch padding, parameter plumbing)
# ----------------------------------------------------------------------------
@jax.jit
def lstm2seq_attn_context_forward(params, line_tokens, context_tokens):
    B, T = line_tokens.shape
    D = params["word_emb"].shape[1]
    E = params["ctx_emb"].shape[1]
    H = params["w_hh"].shape[-1] // 4
    C, L = context_tokens.shape[1], context_tokens.shape[2]

    b_tile, Bp = _choose_batch_tiling(B, T, D, H, C, L, E)

    # rnn2seqencoder inputs: gather word embeddings directly in TIME-MAJOR order (no
    # activation transpose in the wrapper) and pad batch to the tile size.
    tokens_tm = jnp.transpose(line_tokens)                         # (T, B) int32, trivial
    tokens_tm = jnp.pad(tokens_tm, ((0, 0), (0, Bp - B)))          # pad batch with token 0
    x_tm = jnp.take(params["word_emb"], tokens_tm, axis=0)         # (T, Bp, D) f32

    # context_embedder: token embedding gather (mean over tokens fused in the kernel),
    # blocked by the same batch tile as the LSTM inputs.
    ctx_tok = jnp.take(params["ctx_emb"], context_tokens, axis=0)  # (B, C, L, E)
    ctx_tok = jnp.pad(ctx_tok, ((0, Bp - B), (0, 0), (0, 0), (0, 0)))

    out = fused_lstm_attn(x_tm, params["w_ih"], params["w_hh"], params["bias"],
                          ctx_tok, b_tile=b_tile)                  # (Bp, T, H+E)
    return out[:B]


# ----------------------------------------------------------------------------
# Pure-JAX reference (same parameterization; PyTorch LSTM gate order i, f, g, o;
# bias is the pre-summed b_ih + b_hh)
# ----------------------------------------------------------------------------
def pure_jax_reference(params, line_tokens, context_tokens):
    emb = params["word_emb"][line_tokens]                          # (B, T, D)
    B, T, _ = emb.shape
    H = params["w_hh"].shape[-1] // 4
    w_ih, w_hh, bias = params["w_ih"], params["w_hh"], params["bias"]

    def step(carry, x_t):
        h, c = carry
        pre = x_t @ w_ih + h @ w_hh + bias                         # (B, 4H)
        i_g = jax.nn.sigmoid(pre[:, 0 * H:1 * H])
        f_g = jax.nn.sigmoid(pre[:, 1 * H:2 * H])
        g_g = jnp.tanh(pre[:, 2 * H:3 * H])
        o_g = jax.nn.sigmoid(pre[:, 3 * H:4 * H])
        c = f_g * c + i_g * g_g
        h = o_g * jnp.tanh(c)
        return (h, c), h

    x_tm = jnp.transpose(emb, (1, 0, 2))
    (_, _), hs = jax.lax.scan(step, (jnp.zeros((B, H)), jnp.zeros((B, H))), x_tm)
    encoding = jnp.transpose(hs, (1, 0, 2))                        # (B, T, H)

    ctx = jnp.mean(params["ctx_emb"][context_tokens], axis=2)      # (B, C, E)
    scores = jnp.einsum("bth,bch->btc", encoding, ctx)             # unscaled dot-product attn
    attn = jax.nn.softmax(scores, axis=-1)
    values = jnp.einsum("btc,bce->bte", attn, ctx)
    return jnp.concatenate([encoding, values], axis=-1)


if __name__ == "__main__":
    # Small, deterministic synthetic configuration
    B, T = 2, 8            # batch, num main-line timesteps
    C, L = 4, 6            # context lines per line, tokens per context line
    VOCAB, CTX_VOCAB = 50, 40
    D = 64                 # word embedding dim
    H = 64                 # LSTM hidden dim
    E = 64                 # context embedding dim (== H so dot-product attention is valid;
                           # H + E == 128 makes the concatenated output exactly lane-dense)

    key = jax.random.PRNGKey(0)
    k_we, k_ce, k_wih, k_whh, k_b, k_lt, k_ct = jax.random.split(key, 7)

    params = {
        "word_emb": jax.random.normal(k_we, (VOCAB, D), jnp.float32) * 0.1,
        "ctx_emb": jax.random.normal(k_ce, (CTX_VOCAB, E), jnp.float32) * 0.1,
        # Fused weight layout, PyTorch gate order (i, f, g, o); bias is b_ih + b_hh pre-summed.
        "w_ih": jax.random.normal(k_wih, (D, 4 * H), jnp.float32) * 0.1,
        "w_hh": jax.random.normal(k_whh, (H, 4 * H), jnp.float32) * 0.1,
        "bias": jax.random.normal(k_b, (1, 4 * H), jnp.float32) * 0.1,
    }
    line_tokens = jax.random.randint(k_lt, (B, T), 0, VOCAB, jnp.int32)
    # All lines carry exactly C context lines (max_num_context_lines == C), so the
    # torch.randn ragged-padding branch is never exercised (see TODO at top).
    context_tokens = jax.random.randint(k_ct, (B, C, L), 0, CTX_VOCAB, jnp.int32)

    out = jax.block_until_ready(lstm2seq_attn_context_forward(params, line_tokens, context_tokens))
    assert out.shape == (B, T, H + E), out.shape

    ref = jax.block_until_ready(pure_jax_reference(params, line_tokens, context_tokens))
    # bf16 MXU operands (all matmuls) + EUP approx reciprocal in softmax -> ~1e-3 level error;
    # tolerance set with comfortable margin against the f32 reference.
    np.testing.assert_allclose(np.asarray(out), np.asarray(ref), rtol=2e-2, atol=2e-2)

    print("KERNEL_OK")
</pallas_src>

<mosaic_0001>
module attributes {stable_mosaic.version = 11 : i64} {
  func.func @_lstm_attn_kernel(%arg0: i32, %arg1: memref<8x8x64xf32, #tpu.memory_space<vmem>>, %arg2: memref<64x256xbf16, #tpu.memory_space<vmem>>, %arg3: memref<64x256xbf16, #tpu.memory_space<vmem>>, %arg4: memref<1x256xf32, #tpu.memory_space<vmem>>, %arg5: memref<8x4x6x64xf32, #tpu.memory_space<vmem>>, %arg6: memref<8x8x128xf32, #tpu.memory_space<vmem>>, %arg7: memref<8x8x256xf32, #tpu.memory_space<vmem>>, %arg8: memref<8x8x64xf32, #tpu.memory_space<vmem>>, %arg9: memref<8x64xf32, #tpu.memory_space<vmem>>, %arg10: memref<8x64xf32, #tpu.memory_space<vmem>>) attributes {dimension_semantics = [#tpu.dimension_semantics<parallel>], iteration_bounds = array<i64: 1>, scalar_prefetch = 0 : i64, scratch_operands = 4 : i64, tpu.core_type = #tpu.core_type<tc>, window_params = [{transform_indices = @transform_0, window_bounds = array<i64: 8, 8, 64>}, {pipeline_mode = #tpu.pipeline_mode<synchronous>, transform_indices = @transform_1, window_bounds = array<i64: 64, 256>}, {pipeline_mode = #tpu.pipeline_mode<synchronous>, transform_indices = @transform_2, window_bounds = array<i64: 64, 256>}, {pipeline_mode = #tpu.pipeline_mode<synchronous>, transform_indices = @transform_3, window_bounds = array<i64: 1, 256>}, {transform_indices = @transform_4, window_bounds = array<i64: 8, 4, 6, 64>}, {transform_indices = @transform_5, window_bounds = array<i64: 8, 8, 128>}]} {
    %c0 = arith.constant 0 : index
    %c0_0 = arith.constant 0 : index
    %c0_1 = arith.constant 0 : index
    %0 = vector.load %arg1[%c0, %c0_0, %c0_1] : memref<8x8x64xf32, #tpu.memory_space<vmem>>, vector<8x8x64xf32>
    %1 = vector.shape_cast %0 : vector<8x8x64xf32> to vector<64x64xf32>
    %2 = arith.truncf %1 : vector<64x64xf32> to vector<64x64xbf16>
    %c0_2 = arith.constant 0 : index
    %c0_3 = arith.constant 0 : index
    %3 = vector.load %arg2[%c0_2, %c0_3] : memref<64x256xbf16, #tpu.memory_space<vmem>>, vector<64x256xbf16>
    %cst = arith.constant dense<0.000000e+00> : vector<64x256xf32>
    %4 = tpu.matmul %2, %3, %cst {dimension_numbers = #tpu.dot_dimension_numbers<[1], [0], [0], [1], [0, 0, 1, 1], [], []>} : vector<64x64xbf16>, vector<64x256xbf16>, vector<64x256xf32> -> vector<64x256xf32>
    %c0_4 = arith.constant 0 : index
    %c0_5 = arith.constant 0 : index
    %5 = vector.load %arg4[%c0_4, %c0_5] : memref<1x256xf32, #tpu.memory_space<vmem>>, vector<1x256xf32>
    %6 = vector.broadcast %5 : vector<1x256xf32> to vector<64x256xf32>
    %7 = arith.addf %4, %6 : vector<64x256xf32>
    %8 = vector.shape_cast %7 : vector<64x256xf32> to vector<8x8x256xf32>
    %c0_6 = arith.constant 0 : index
    %c0_7 = arith.constant 0 : index
    %c0_8 = arith.constant 0 : index
    %9 = vector.load %arg7[%c0_6, %c0_7, %c0_8] : memref<8x8x256xf32, #tpu.memory_space<vmem>>, vector<8x8x256xf32>
    tpu.vector_store %arg7[%c0_6, %c0_7, %c0_8], %8 {strides = array<i32>} : memref<8x8x256xf32, #tpu.memory_space<vmem>>, vector<8x8x256xf32>,
    %cst_9 = arith.constant 0.000000e+00 : f32
    %10 = vector.broadcast %cst_9 : f32 to vector<8x64xf32>
    %c0_10 = arith.constant 0 : index
    %c0_11 = arith.constant 0 : index
    %11 = vector.load %arg9[%c0_10, %c0_11] : memref<8x64xf32, #tpu.memory_space<vmem>>, vector<8x64xf32>
    tpu.vector_store %arg9[%c0_10, %c0_11], %10 {strides = array<i32>} : memref<8x64xf32, #tpu.memory_space<vmem>>, vector<8x64xf32>,
    %cst_12 = arith.constant 0.000000e+00 : f32
    %12 = vector.broadcast %cst_12 : f32 to vector<8x64xf32>
    %c0_13 = arith.constant 0 : index
    %c0_14 = arith.constant 0 : index
    %13 = vector.load %arg10[%c0_13, %c0_14] : memref<8x64xf32, #tpu.memory_space<vmem>>, vector<8x64xf32>
    tpu.vector_store %arg10[%c0_13, %c0_14], %12 {strides = array<i32>} : memref<8x64xf32, #tpu.memory_space<vmem>>, vector<8x64xf32>,
    %c0_15 = arith.constant 0 : index
    %c0_16 = arith.constant 0 : index
    %14 = vector.load %arg3[%c0_15, %c0_16] : memref<64x256xbf16, #tpu.memory_space<vmem>>, vector<64x256xbf16>
    %c0_i32 = arith.constant 0 : i32
    %c0_17 = arith.constant 0 : index
    %c0_18 = arith.constant 0 : index
    %15 = vector.load %arg9[%c0_17, %c0_18] : memref<8x64xf32, #tpu.memory_space<vmem>>, vector<8x64xf32>
    %c0_19 = arith.constant 0 : index
    %c0_20 = arith.constant 0 : index
    %16 = vector.load %arg10[%c0_19, %c0_20] : memref<8x64xf32, #tpu.memory_space<vmem>>, vector<8x64xf32>
    %17 = arith.index_cast %c0_i32 : i32 to index
    %c0_21 = arith.constant 0 : index
    %c0_22 = arith.constant 0 : index
    %18 = vector.load %arg7[%17, %c0_21, %c0_22] : memref<8x8x256xf32, #tpu.memory_space<vmem>>, vector<1x8x256xf32>
    %19 = vector.shape_cast %18 : vector<1x8x256xf32> to vector<8x256xf32>
    %20 = arith.truncf %15 : vector<8x64xf32> to vector<8x64xbf16>
    %cst_23 = arith.constant dense<0.000000e+00> : vector<8x256xf32>
    %21 = tpu.matmul %20, %14, %cst_23 {dimension_numbers = #tpu.dot_dimension_numbers<[1], [0], [0], [1], [0, 0, 1, 1], [], []>} : vector<8x64xbf16>, vector<64x256xbf16>, vector<8x256xf32> -> vector<8x256xf32>
    %22 = arith.addf %19, %21 : vector<8x256xf32>
    %23 = vector.extract_strided_slice %22 {offsets = [0, 0], sizes = [8, 64], strides = [1, 1]} : vector<8x256xf32> to vector<8x64xf32>
    %cst_24 = arith.constant 5.000000e-01 : f32
    %24 = vector.broadcast %cst_24 : f32 to vector<8x64xf32>
    %25 = arith.mulf %24, %23 : vector<8x64xf32>
    %26 = math.tanh %25 : vector<8x64xf32>
    %cst_25 = arith.constant 5.000000e-01 : f32
    %27 = vector.broadcast %cst_25 : f32 to vector<8x64xf32>
    %28 = arith.mulf %27, %26 : vector<8x64xf32>
    %cst_26 = arith.constant 5.000000e-01 : f32
    %29 = vector.broadcast %cst_26 : f32 to vector<8x64xf32>
    %30 = arith.addf %28, %29 : vector<8x64xf32>
    %31 = vector.extract_strided_slice %22 {offsets = [0, 64], sizes = [8, 64], strides = [1, 1]} : vector<8x256xf32> to vector<8x64xf32>
    %cst_27 = arith.constant 5.000000e-01 : f32
    %32 = vector.broadcast %cst_27 : f32 to vector<8x64xf32>
    %33 = arith.mulf %32, %31 : vector<8x64xf32>
    %34 = math.tanh %33 : vector<8x64xf32>
    %cst_28 = arith.constant 5.000000e-01 : f32
    %35 = vector.broadcast %cst_28 : f32 to vector<8x64xf32>
    %36 = arith.mulf %35, %34 : vector<8x64xf32>
    %cst_29 = arith.constant 5.000000e-01 : f32
    %37 = vector.broadcast %cst_29 : f32 to vector<8x64xf32>
    %38 = arith.addf %36, %37 : vector<8x64xf32>
    %39 = vector.extract_strided_slice %22 {offsets = [0, 128], sizes = [8, 64], strides = [1, 1]} : vector<8x256xf32> to vector<8x64xf32>
    %40 = math.tanh %39 : vector<8x64xf32>
    %41 = vector.extract_strided_slice %22 {offsets = [0, 192], sizes = [8, 64], strides = [1, 1]} : vector<8x256xf32> to vector<8x64xf32>
    %cst_30 = arith.constant 5.000000e-01 : f32
    %42 = vector.broadcast %cst_30 : f32 to vector<8x64xf32>
    %43 = arith.mulf %42, %41 : vector<8x64xf32>
    %44 = math.tanh %43 : vector<8x64xf32>
    %cst_31 = arith.constant 5.000000e-01 : f32
    %45 = vector.broadcast %cst_31 : f32 to vector<8x64xf32>
    %46 = arith.mulf %45, %44 : vector<8x64xf32>
    %cst_32 = arith.constant 5.000000e-01 : f32
    %47 = vector.broadcast %cst_32 : f32 to vector<8x64xf32>
    %48 = arith.addf %46, %47 : vector<8x64xf32>
    %49 = arith.mulf %38, %16 : vector<8x64xf32>
    %50 = arith.mulf %30, %40 : vector<8x64xf32>
    %51 = arith.addf %49, %50 : vector<8x64xf32>
    %52 = math.tanh %51 : vector<8x64xf32>
    %53 = arith.mulf %48, %52 : vector<8x64xf32>
    %c0_33 = arith.constant 0 : index
    %c0_34 = arith.constant 0 : index
    %54 = vector.load %arg10[%c0_33, %c0_34] : memref<8x64xf32, #tpu.memory_space<vmem>>, vector<8x64xf32>
    tpu.vector_store %arg10[%c0_33, %c0_34], %51 {strides = array<i32>} : memref<8x64xf32, #tpu.memory_space<vmem>>, vector<8x64xf32>,
    %c0_35 = arith.constant 0 : index
    %c0_36 = arith.constant 0 : index
    %55 = vector.load %arg9[%c0_35, %c0_36] : memref<8x64xf32, #tpu.memory_space<vmem>>, vector<8x64xf32>
    tpu.vector_store %arg9[%c0_35, %c0_36], %53 {strides = array<i32>} : memref<8x64xf32, #tpu.memory_space<vmem>>, vector<8x64xf32>,
    %56 = arith.index_cast %c0_i32 : i32 to index
    %c0_37 = arith.constant 0 : index
    %c0_38 = arith.constant 0 : index
    %57 = vector.load %arg8[%56, %c0_37, %c0_38] : memref<8x8x64xf32, #tpu.memory_space<vmem>>, vector<1x8x64xf32>
    %58 = vector.shape_cast %57 : vector<1x8x64xf32> to vector<8x64xf32>
    %59 = vector.shape_cast %53 : vector<8x64xf32> to vector<1x8x64xf32>
    tpu.vector_store %arg8[%56, %c0_37, %c0_38], %59 {strides = array<i32>} : memref<8x8x64xf32, #tpu.memory_space<vmem>>, vector<1x8x64xf32>,
    %c1_i32 = arith.constant 1 : i32
    %c0_39 = arith.constant 0 : index
    %c0_40 = arith.constant 0 : index
    %60 = vector.load %arg9[%c0_39, %c0_40] : memref<8x64xf32, #tpu.memory_space<vmem>>, vector<8x64xf32>
    %c0_41 = arith.constant 0 : index
    %c0_42 = arith.constant 0 : index
    %61 = vector.load %arg10[%c0_41, %c0_42] : memref<8x64xf32, #tpu.memory_space<vmem>>, vector<8x64xf32>
    %62 = arith.index_cast %c1_i32 : i32 to index
    %c0_43 = arith.constant 0 : index
    %c0_44 = arith.constant 0 : index
    %63 = vector.load %arg7[%62, %c0_43, %c0_44] : memref<8x8x256xf32, #tpu.memory_space<vmem>>, vector<1x8x256xf32>
    %64 = vector.shape_cast %63 : vector<1x8x256xf32> to vector<8x256xf32>
    %65 = arith.truncf %60 : vector<8x64xf32> to vector<8x64xbf16>
    %cst_45 = arith.constant dense<0.000000e+00> : vector<8x256xf32>
    %66 = tpu.matmul %65, %14, %cst_45 {dimension_numbers = #tpu.dot_dimension_numbers<[1], [0], [0], [1], [0, 0, 1, 1], [], []>} : vector<8x64xbf16>, vector<64x256xbf16>, vector<8x256xf32> -> vector<8x256xf32>
    %67 = arith.addf %64, %66 : vector<8x256xf32>
    %68 = vector.extract_strided_slice %67 {offsets = [0, 0], sizes = [8, 64], strides = [1, 1]} : vector<8x256xf32> to vector<8x64xf32>
    %cst_46 = arith.constant 5.000000e-01 : f32
    %69 = vector.broadcast %cst_46 : f32 to vector<8x64xf32>
    %70 = arith.mulf %69, %68 : vector<8x64xf32>
    %71 = math.tanh %70 : vector<8x64xf32>
    %cst_47 = arith.constant 5.000000e-01 : f32
    %72 = vector.broadcast %cst_47 : f32 to vector<8x64xf32>
    %73 = arith.mulf %72, %71 : vector<8x64xf32>
    %cst_48 = arith.constant 5.000000e-01 : f32
    %74 = vector.broadcast %cst_48 : f32 to vector<8x64xf32>
    %75 = arith.addf %73, %74 : vector<8x64xf32>
    %76 = vector.extract_strided_slice %67 {offsets = [0, 64], sizes = [8, 64], strides = [1, 1]} : vector<8x256xf32> to vector<8x64xf32>
    %cst_49 = arith.constant 5.000000e-01 : f32
    %77 = vector.broadcast %cst_49 : f32 to vector<8x64xf32>
    %78 = arith.mulf %77, %76 : vector<8x64xf32>
    %79 = math.tanh %78 : vector<8x64xf32>
    %cst_50 = arith.constant 5.000000e-01 : f32
    %80 = vector.broadcast %cst_50 : f32 to vector<8x64xf32>
    %81 = arith.mulf %80, %79 : vector<8x64xf32>
    %cst_51 = arith.constant 5.000000e-01 : f32
    %82 = vector.broadcast %cst_51 : f32 to vector<8x64xf32>
    %83 = arith.addf %81, %82 : vector<8x64xf32>
    %84 = vector.extract_strided_slice %67 {offsets = [0, 128], sizes = [8, 64], strides = [1, 1]} : vector<8x256xf32> to vector<8x64xf32>
    %85 = math.tanh %84 : vector<8x64xf32>
    %86 = vector.extract_strided_slice %67 {offsets = [0, 192], sizes = [8, 64], strides = [1, 1]} : vector<8x256xf32> to vector<8x64xf32>
    %cst_52 = arith.constant 5.000000e-01 : f32
    %87 = vector.broadcast %cst_52 : f32 to vector<8x64xf32>
    %88 = arith.mulf %87, %86 : vector<8x64xf32>
    %89 = math.tanh %88 : vector<8x64xf32>
    %cst_53 = arith.constant 5.000000e-01 : f32
    %90 = vector.broadcast %cst_53 : f32 to vector<8x64xf32>
    %91 = arith.mulf %90, %89 : vector<8x64xf32>
    %cst_54 = arith.constant 5.000000e-01 : f32
    %92 = vector.broadcast %cst_54 : f32 to vector<8x64xf32>
    %93 = arith.addf %91, %92 : vector<8x64xf32>
    %94 = arith.mulf %83, %61 : vector<8x64xf32>
    %95 = arith.mulf %75, %85 : vector<8x64xf32>
    %96 = arith.addf %94, %95 : vector<8x64xf32>
    %97 = math.tanh %96 : vector<8x64xf32>
    %98 = arith.mulf %93, %97 : vector<8x64xf32>
    %c0_55 = arith.constant 0 : index
    %c0_56 = arith.constant 0 : index
    %99 = vector.load %arg10[%c0_55, %c0_56] : memref<8x64xf32, #tpu.memory_space<vmem>>, vector<8x64xf32>
    tpu.vector_store %arg10[%c0_55, %c0_56], %96 {strides = array<i32>} : memref<8x64xf32, #tpu.memory_space<vmem>>, vector<8x64xf32>,
    %c0_57 = arith.constant 0 : index
    %c0_58 = arith.constant 0 : index
    %100 = vector.load %arg9[%c0_57, %c0_58] : memref<8x64xf32, #tpu.memory_space<vmem>>, vector<8x64xf32>
    tpu.vector_store %arg9[%c0_57, %c0_58], %98 {strides = array<i32>} : memref<8x64xf32, #tpu.memory_space<vmem>>, vector<8x64xf32>,
    %101 = arith.index_cast %c1_i32 : i32 to index
    %c0_59 = arith.constant 0 : index
    %c0_60 = arith.constant 0 : index
    %102 = vector.load %arg8[%101, %c0_59, %c0_60] : memref<8x8x64xf32, #tpu.memory_space<vmem>>, vector<1x8x64xf32>
    %103 = vector.shape_cast %102 : vector<1x8x64xf32> to vector<8x64xf32>
    %104 = vector.shape_cast %98 : vector<8x64xf32> to vector<1x8x64xf32>
    tpu.vector_store %arg8[%101, %c0_59, %c0_60], %104 {strides = array<i32>} : memref<8x8x64xf32, #tpu.memory_space<vmem>>, vector<1x8x64xf32>,
    %c2_i32 = arith.constant 2 : i32
    %c0_61 = arith.constant 0 : index
    %c0_62 = arith.constant 0 : index
    %105 = vector.load %arg9[%c0_61, %c0_62] : memref<8x64xf32, #tpu.memory_space<vmem>>, vector<8x64xf32>
    %c0_63 = arith.constant 0 : index
    %c0_64 = arith.constant 0 : index
    %106 = vector.load %arg10[%c0_63, %c0_64] : memref<8x64xf32, #tpu.memory_space<vmem>>, vector<8x64xf32>
    %107 = arith.index_cast %c2_i32 : i32 to index
    %c0_65 = arith.constant 0 : index
    %c0_66 = arith.constant 0 : index
    %108 = vector.load %arg7[%107, %c0_65, %c0_66] : memref<8x8x256xf32, #tpu.memory_space<vmem>>, vector<1x8x256xf32>
    %109 = vector.shape_cast %108 : vector<1x8x256xf32> to vector<8x256xf32>
    %110 = arith.truncf %105 : vector<8x64xf32> to vector<8x64xbf16>
    %cst_67 = arith.constant dense<0.000000e+00> : vector<8x256xf32>
    %111 = tpu.matmul %110, %14, %cst_67 {dimension_numbers = #tpu.dot_dimension_numbers<[1], [0], [0], [1], [0, 0, 1, 1], [], []>} : vector<8x64xbf16>, vector<64x256xbf16>, vector<8x256xf32> -> vector<8x256xf32>
    %112 = arith.addf %109, %111 : vector<8x256xf32>
    %113 = vector.extract_strided_slice %112 {offsets = [0, 0], sizes = [8, 64], strides = [1, 1]} : vector<8x256xf32> to vector<8x64xf32>
    %cst_68 = arith.constant 5.000000e-01 : f32
    %114 = vector.broadcast %cst_68 : f32 to vector<8x64xf32>
    %115 = arith.mulf %114, %113 : vector<8x64xf32>
    %116 = math.tanh %115 : vector<8x64xf32>
    %cst_69 = arith.constant 5.000000e-01 : f32
    %117 = vector.broadcast %cst_69 : f32 to vector<8x64xf32>
    %118 = arith.mulf %117, %116 : vector<8x64xf32>
    %cst_70 = arith.constant 5.000000e-01 : f32
    %119 = vector.broadcast %cst_70 : f32 to vector<8x64xf32>
    %120 = arith.addf %118, %119 : vector<8x64xf32>
    %121 = vector.extract_strided_slice %112 {offsets = [0, 64], sizes = [8, 64], strides = [1, 1]} : vector<8x256xf32> to vector<8x64xf32>
    %cst_71 = arith.constant 5.000000e-01 : f32
    %122 = vector.broadcast %cst_71 : f32 to vector<8x64xf32>
    %123 = arith.mulf %122, %121 : vector<8x64xf32>
    %124 = math.tanh %123 : vector<8x64xf32>
    %cst_72 = arith.constant 5.000000e-01 : f32
    %125 = vector.broadcast %cst_72 : f32 to vector<8x64xf32>
    %126 = arith.mulf %125, %124 : vector<8x64xf32>
    %cst_73 = arith.constant 5.000000e-01 : f32
    %127 = vector.broadcast %cst_73 : f32 to vector<8x64xf32>
    %128 = arith.addf %126, %127 : vector<8x64xf32>
    %129 = vector.extract_strided_slice %112 {offsets = [0, 128], sizes = [8, 64], strides = [1, 1]} : vector<8x256xf32> to vector<8x64xf32>
    %130 = math.tanh %129 : vector<8x64xf32>
    %131 = vector.extract_strided_slice %112 {offsets = [0, 192], sizes = [8, 64], strides = [1, 1]} : vector<8x256xf32> to vector<8x64xf32>
    %cst_74 = arith.constant 5.000000e-01 : f32
    %132 = vector.broadcast %cst_74 : f32 to vector<8x64xf32>
    %133 = arith.mulf %132, %131 : vector<8x64xf32>
    %134 = math.tanh %133 : vector<8x64xf32>
    %cst_75 = arith.constant 5.000000e-01 : f32
    %135 = vector.broadcast %cst_75 : f32 to vector<8x64xf32>
    %136 = arith.mulf %135, %134 : vector<8x64xf32>
    %cst_76 = arith.constant 5.000000e-01 : f32
    %137 = vector.broadcast %cst_76 : f32 to vector<8x64xf32>
    %138 = arith.addf %136, %137 : vector<8x64xf32>
    %139 = arith.mulf %128, %106 : vector<8x64xf32>
    %140 = arith.mulf %120, %130 : vector<8x64xf32>
    %141 = arith.addf %139, %140 : vector<8x64xf32>
    %142 = math.tanh %141 : vector<8x64xf32>
    %143 = arith.mulf %138, %142 : vector<8x64xf32>
    %c0_77 = arith.constant 0 : index
    %c0_78 = arith.constant 0 : index
    %144 = vector.load %arg10[%c0_77, %c0_78] : memref<8x64xf32, #tpu.memory_space<vmem>>, vector<8x64xf32>
    tpu.vector_store %arg10[%c0_77, %c0_78], %141 {strides = array<i32>} : memref<8x64xf32, #tpu.memory_space<vmem>>, vector<8x64xf32>,
    %c0_79 = arith.constant 0 : index
    %c0_80 = arith.constant 0 : index
    %145 = vector.load %arg9[%c0_79, %c0_80] : memref<8x64xf32, #tpu.memory_space<vmem>>, vector<8x64xf32>
    tpu.vector_store %arg9[%c0_79, %c0_80], %143 {strides = array<i32>} : memref<8x64xf32, #tpu.memory_space<vmem>>, vector<8x64xf32>,
    %146 = arith.index_cast %c2_i32 : i32 to index
    %c0_81 = arith.constant 0 : index
    %c0_82 = arith.constant 0 : index
    %147 = vector.load %arg8[%146, %c0_81, %c0_82] : memref<8x8x64xf32, #tpu.memory_space<vmem>>, vector<1x8x64xf32>
    %148 = vector.shape_cast %147 : vector<1x8x64xf32> to vector<8x64xf32>
    %149 = vector.shape_cast %143 : vector<8x64xf32> to vector<1x8x64xf32>
    tpu.vector_store %arg8[%146, %c0_81, %c0_82], %149 {strides = array<i32>} : memref<8x8x64xf32, #tpu.memory_space<vmem>>, vector<1x8x64xf32>,
    %c3_i32 = arith.constant 3 : i32
    %c0_83 = arith.constant 0 : index
    %c0_84 = arith.constant 0 : index
    %150 = vector.load %arg9[%c0_83, %c0_84] : memref<8x64xf32, #tpu.memory_space<vmem>>, vector<8x64xf32>
    %c0_85 = arith.constant 0 : index
    %c0_86 = arith.constant 0 : index
    %151 = vector.load %arg10[%c0_85, %c0_86] : memref<8x64xf32, #tpu.memory_space<vmem>>, vector<8x64xf32>
    %152 = arith.index_cast %c3_i32 : i32 to index
    %c0_87 = arith.constant 0 : index
    %c0_88 = arith.constant 0 : index
    %153 = vector.load %arg7[%152, %c0_87, %c0_88] : memref<8x8x256xf32, #tpu.memory_space<vmem>>, vector<1x8x256xf32>
    %154 = vector.shape_cast %153 : vector<1x8x256xf32> to vector<8x256xf32>
    %155 = arith.truncf %150 : vector<8x64xf32> to vector<8x64xbf16>
    %cst_89 = arith.constant dense<0.000000e+00> : vector<8x256xf32>
    %156 = tpu.matmul %155, %14, %cst_89 {dimension_numbers = #tpu.dot_dimension_numbers<[1], [0], [0], [1], [0, 0, 1, 1], [], []>} : vector<8x64xbf16>, vector<64x256xbf16>, vector<8x256xf32> -> vector<8x256xf32>
    %157 = arith.addf %154, %156 : vector<8x256xf32>
    %158 = vector.extract_strided_slice %157 {offsets = [0, 0], sizes = [8, 64], strides = [1, 1]} : vector<8x256xf32> to vector<8x64xf32>
    %cst_90 = arith.constant 5.000000e-01 : f32
    %159 = vector.broadcast %cst_90 : f32 to vector<8x64xf32>
    %160 = arith.mulf %159, %158 : vector<8x64xf32>
    %161 = math.tanh %160 : vector<8x64xf32>
    %cst_91 = arith.constant 5.000000e-01 : f32
    %162 = vector.broadcast %cst_91 : f32 to vector<8x64xf32>
    %163 = arith.mulf %162, %161 : vector<8x64xf32>
    %cst_92 = arith.constant 5.000000e-01 : f32
    %164 = vector.broadcast %cst_92 : f32 to vector<8x64xf32>
    %165 = arith.addf %163, %164 : vector<8x64xf32>
    %166 = vector.extract_strided_slice %157 {offsets = [0, 64], sizes = [8, 64], strides = [1, 1]} : vector<8x256xf32> to vector<8x64xf32>
    %cst_93 = arith.constant 5.000000e-01 : f32
    %167 = vector.broadcast %cst_93 : f32 to vector<8x64xf32>
    %168 = arith.mulf %167, %166 : vector<8x64xf32>
    %169 = math.tanh %168 : vector<8x64xf32>
    %cst_94 = arith.constant 5.000000e-01 : f32
    %170 = vector.broadcast %cst_94 : f32 to vector<8x64xf32>
    %171 = arith.mulf %170, %169 : vector<8x64xf32>
    %cst_95 = arith.constant 5.000000e-01 : f32
    %172 = vector.broadcast %cst_95 : f32 to vector<8x64xf32>
    %173 = arith.addf %171, %172 : vector<8x64xf32>
    %174 = vector.extract_strided_slice %157 {offsets = [0, 128], sizes = [8, 64], strides = [1, 1]} : vector<8x256xf32> to vector<8x64xf32>
    %175 = math.tanh %174 : vector<8x64xf32>
    %176 = vector.extract_strided_slice %157 {offsets = [0, 192], sizes = [8, 64], strides = [1, 1]} : vector<8x256xf32> to vector<8x64xf32>
    %cst_96 = arith.constant 5.000000e-01 : f32
    %177 = vector.broadcast %cst_96 : f32 to vector<8x64xf32>
    %178 = arith.mulf %177, %176 : vector<8x64xf32>
    %179 = math.tanh %178 : vector<8x64xf32>
    %cst_97 = arith.constant 5.000000e-01 : f32
    %180 = vector.broadcast %cst_97 : f32 to vector<8x64xf32>
    %181 = arith.mulf %180, %179 : vector<8x64xf32>
    %cst_98 = arith.constant 5.000000e-01 : f32
    %182 = vector.broadcast %cst_98 : f32 to vector<8x64xf32>
    %183 = arith.addf %181, %182 : vector<8x64xf32>
    %184 = arith.mulf %173, %151 : vector<8x64xf32>
    %185 = arith.mulf %165, %175 : vector<8x64xf32>
    %186 = arith.addf %184, %185 : vector<8x64xf32>
    %187 = math.tanh %186 : vector<8x64xf32>
    %188 = arith.mulf %183, %187 : vector<8x64xf32>
    %c0_99 = arith.constant 0 : index
    %c0_100 = arith.constant 0 : index
    %189 = vector.load %arg10[%c0_99, %c0_100] : memref<8x64xf32, #tpu.memory_space<vmem>>, vector<8x64xf32>
    tpu.vector_store %arg10[%c0_99, %c0_100], %186 {strides = array<i32>} : memref<8x64xf32, #tpu.memory_space<vmem>>, vector<8x64xf32>,
    %c0_101 = arith.constant 0 : index
    %c0_102 = arith.constant 0 : index
    %190 = vector.load %arg9[%c0_101, %c0_102] : memref<8x64xf32, #tpu.memory_space<vmem>>, vector<8x64xf32>
    tpu.vector_store %arg9[%c0_101, %c0_102], %188 {strides = array<i32>} : memref<8x64xf32, #tpu.memory_space<vmem>>, vector<8x64xf32>,
    %191 = arith.index_cast %c3_i32 : i32 to index
    %c0_103 = arith.constant 0 : index
    %c0_104 = arith.constant 0 : index
    %192 = vector.load %arg8[%191, %c0_103, %c0_104] : memref<8x8x64xf32, #tpu.memory_space<vmem>>, vector<1x8x64xf32>
    %193 = vector.shape_cast %192 : vector<1x8x64xf32> to vector<8x64xf32>
    %194 = vector.shape_cast %188 : vector<8x64xf32> to vector<1x8x64xf32>
    tpu.vector_store %arg8[%191, %c0_103, %c0_104], %194 {strides = array<i32>} : memref<8x8x64xf32, #tpu.memory_space<vmem>>, vector<1x8x64xf32>,
    %c4_i32 = arith.constant 4 : i32
    %c0_105 = arith.constant 0 : index
    %c0_106 = arith.constant 0 : index
    %195 = vector.load %arg9[%c0_105, %c0_106] : memref<8x64xf32, #tpu.memory_space<vmem>>, vector<8x64xf32>
    %c0_107 = arith.constant 0 : index
    %c0_108 = arith.constant 0 : index
    %196 = vector.load %arg10[%c0_107, %c0_108] : memref<8x64xf32, #tpu.memory_space<vmem>>, vector<8x64xf32>
    %197 = arith.index_cast %c4_i32 : i32 to index
    %c0_109 = arith.constant 0 : index
    %c0_110 = arith.constant 0 : index
    %198 = vector.load %arg7[%197, %c0_109, %c0_110] : memref<8x8x256xf32, #tpu.memory_space<vmem>>, vector<1x8x256xf32>
    %199 = vector.shape_cast %198 : vector<1x8x256xf32> to vector<8x256xf32>
    %200 = arith.truncf %195 : vector<8x64xf32> to vector<8x64xbf16>
    %cst_111 = arith.constant dense<0.000000e+00> : vector<8x256xf32>
    %201 = tpu.matmul %200, %14, %cst_111 {dimension_numbers = #tpu.dot_dimension_numbers<[1], [0], [0], [1], [0, 0, 1, 1], [], []>} : vector<8x64xbf16>, vector<64x256xbf16>, vector<8x256xf32> -> vector<8x256xf32>
    %202 = arith.addf %199, %201 : vector<8x256xf32>
    %203 = vector.extract_strided_slice %202 {offsets = [0, 0], sizes = [8, 64], strides = [1, 1]} : vector<8x256xf32> to vector<8x64xf32>
    %cst_112 = arith.constant 5.000000e-01 : f32
    %204 = vector.broadcast %cst_112 : f32 to vector<8x64xf32>
    %205 = arith.mulf %204, %203 : vector<8x64xf32>
    %206 = math.tanh %205 : vector<8x64xf32>
    %cst_113 = arith.constant 5.000000e-01 : f32
    %207 = vector.broadcast %cst_113 : f32 to vector<8x64xf32>
    %208 = arith.mulf %207, %206 : vector<8x64xf32>
    %cst_114 = arith.constant 5.000000e-01 : f32
    %209 = vector.broadcast %cst_114 : f32 to vector<8x64xf32>
    %210 = arith.addf %208, %209 : vector<8x64xf32>
    %211 = vector.extract_strided_slice %202 {offsets = [0, 64], sizes = [8, 64], strides = [1, 1]} : vector<8x256xf32> to vector<8x64xf32>
    %cst_115 = arith.constant 5.000000e-01 : f32
    %212 = vector.broadcast %cst_115 : f32 to vector<8x64xf32>
    %213 = arith.mulf %212, %211 : vector<8x64xf32>
    %214 = math.tanh %213 : vector<8x64xf32>
    %cst_116 = arith.constant 5.000000e-01 : f32
    %215 = vector.broadcast %cst_116 : f32 to vector<8x64xf32>
    %216 = arith.mulf %215, %214 : vector<8x64xf32>
    %cst_117 = arith.constant 5.000000e-01 : f32
    %217 = vector.broadcast %cst_117 : f32 to vector<8x64xf32>
    %218 = arith.addf %216, %217 : vector<8x64xf32>
    %219 = vector.extract_strided_slice %202 {offsets = [0, 128], sizes = [8, 64], strides = [1, 1]} : vector<8x256xf32> to vector<8x64xf32>
    %220 = math.tanh %219 : vector<8x64xf32>
    %221 = vector.extract_strided_slice %202 {offsets = [0, 192], sizes = [8, 64], strides = [1, 1]} : vector<8x256xf32> to vector<8x64xf32>
    %cst_118 = arith.constant 5.000000e-01 : f32
    %222 = vector.broadcast %cst_118 : f32 to vector<8x64xf32>
    %223 = arith.mulf %222, %221 : vector<8x64xf32>
    %224 = math.tanh %223 : vector<8x64xf32>
    %cst_119 = arith.constant 5.000000e-01 : f32
    %225 = vector.broadcast %cst_119 : f32 to vector<8x64xf32>
    %226 = arith.mulf %225, %224 : vector<8x64xf32>
    %cst_120 = arith.constant 5.000000e-01 : f32
    %227 = vector.broadcast %cst_120 : f32 to vector<8x64xf32>
    %228 = arith.addf %226, %227 : vector<8x64xf32>
    %229 = arith.mulf %218, %196 : vector<8x64xf32>
    %230 = arith.mulf %210, %220 : vector<8x64xf32>
    %231 = arith.addf %229, %230 : vector<8x64xf32>
    %232 = math.tanh %231 : vector<8x64xf32>
    %233 = arith.mulf %228, %232 : vector<8x64xf32>
    %c0_121 = arith.constant 0 : index
    %c0_122 = arith.constant 0 : index
    %234 = vector.load %arg10[%c0_121, %c0_122] : memref<8x64xf32, #tpu.memory_space<vmem>>, vector<8x64xf32>
    tpu.vector_store %arg10[%c0_121, %c0_122], %231 {strides = array<i32>} : memref<8x64xf32, #tpu.memory_space<vmem>>, vector<8x64xf32>,
    %c0_123 = arith.constant 0 : index
    %c0_124 = arith.constant 0 : index
    %235 = vector.load %arg9[%c0_123, %c0_124] : memref<8x64xf32, #tpu.memory_space<vmem>>, vector<8x64xf32>
    tpu.vector_store %arg9[%c0_123, %c0_124], %233 {strides = array<i32>} : memref<8x64xf32, #tpu.memory_space<vmem>>, vector<8x64xf32>,
    %236 = arith.index_cast %c4_i32 : i32 to index
    %c0_125 = arith.constant 0 : index
    %c0_126 = arith.constant 0 : index
    %237 = vector.load %arg8[%236, %c0_125, %c0_126] : memref<8x8x64xf32, #tpu.memory_space<vmem>>, vector<1x8x64xf32>
    %238 = vector.shape_cast %237 : vector<1x8x64xf32> to vector<8x64xf32>
    %239 = vector.shape_cast %233 : vector<8x64xf32> to vector<1x8x64xf32>
    tpu.vector_store %arg8[%236, %c0_125, %c0_126], %239 {strides = array<i32>} : memref<8x8x64xf32, #tpu.memory_space<vmem>>, vector<1x8x64xf32>,
    %c5_i32 = arith.constant 5 : i32
    %c0_127 = arith.constant 0 : index
    %c0_128 = arith.constant 0 : index
    %240 = vector.load %arg9[%c0_127, %c0_128] : memref<8x64xf32, #tpu.memory_space<vmem>>, vector<8x64xf32>
    %c0_129 = arith.constant 0 : index
    %c0_130 = arith.constant 0 : index
    %241 = vector.load %arg10[%c0_129, %c0_130] : memref<8x64xf32, #tpu.memory_space<vmem>>, vector<8x64xf32>
    %242 = arith.index_cast %c5_i32 : i32 to index
    %c0_131 = arith.constant 0 : index
    %c0_132 = arith.constant 0 : index
    %243 = vector.load %arg7[%242, %c0_131, %c0_132] : memref<8x8x256xf32, #tpu.memory_space<vmem>>, vector<1x8x256xf32>
    %244 = vector.shape_cast %243 : vector<1x8x256xf32> to vector<8x256xf32>
    %245 = arith.truncf %240 : vector<8x64xf32> to vector<8x64xbf16>
    %cst_133 = arith.constant dense<0.000000e+00> : vector<8x256xf32>
    %246 = tpu.matmul %245, %14, %cst_133 {dimension_numbers = #tpu.dot_dimension_numbers<[1], [0], [0], [1], [0, 0, 1, 1], [], []>} : vector<8x64xbf16>, vector<64x256xbf16>, vector<8x256xf32> -> vector<8x256xf32>
    %247 = arith.addf %244, %246 : vector<8x256xf32>
    %248 = vector.extract_strided_slice %247 {offsets = [0, 0], sizes = [8, 64], strides = [1, 1]} : vector<8x256xf32> to vector<8x64xf32>
    %cst_134 = arith.constant 5.000000e-01 : f32
    %249 = vector.broadcast %cst_134 : f32 to vector<8x64xf32>
    %250 = arith.mulf %249, %248 : vector<8x64xf32>
    %251 = math.tanh %250 : vector<8x64xf32>
    %cst_135 = arith.constant 5.000000e-01 : f32
    %252 = vector.broadcast %cst_135 : f32 to vector<8x64xf32>
    %253 = arith.mulf %252, %251 : vector<8x64xf32>
    %cst_136 = arith.constant 5.000000e-01 : f32
    %254 = vector.broadcast %cst_136 : f32 to vector<8x64xf32>
    %255 = arith.addf %253, %254 : vector<8x64xf32>
    %256 = vector.extract_strided_slice %247 {offsets = [0, 64], sizes = [8, 64], strides = [1, 1]} : vector<8x256xf32> to vector<8x64xf32>
    %cst_137 = arith.constant 5.000000e-01 : f32
    %257 = vector.broadcast %cst_137 : f32 to vector<8x64xf32>
    %258 = arith.mulf %257, %256 : vector<8x64xf32>
    %259 = math.tanh %258 : vector<8x64xf32>
    %cst_138 = arith.constant 5.000000e-01 : f32
    %260 = vector.broadcast %cst_138 : f32 to vector<8x64xf32>
    %261 = arith.mulf %260, %259 : vector<8x64xf32>
    %cst_139 = arith.constant 5.000000e-01 : f32
    %262 = vector.broadcast %cst_139 : f32 to vector<8x64xf32>
    %263 = arith.addf %261, %262 : vector<8x64xf32>
    %264 = vector.extract_strided_slice %247 {offsets = [0, 128], sizes = [8, 64], strides = [1, 1]} : vector<8x256xf32> to vector<8x64xf32>
    %265 = math.tanh %264 : vector<8x64xf32>
    %266 = vector.extract_strided_slice %247 {offsets = [0, 192], sizes = [8, 64], strides = [1, 1]} : vector<8x256xf32> to vector<8x64xf32>
    %cst_140 = arith.constant 5.000000e-01 : f32
    %267 = vector.broadcast %cst_140 : f32 to vector<8x64xf32>
    %268 = arith.mulf %267, %266 : vector<8x64xf32>
    %269 = math.tanh %268 : vector<8x64xf32>
    %cst_141 = arith.constant 5.000000e-01 : f32
    %270 = vector.broadcast %cst_141 : f32 to vector<8x64xf32>
    %271 = arith.mulf %270, %269 : vector<8x64xf32>
    %cst_142 = arith.constant 5.000000e-01 : f32
    %272 = vector.broadcast %cst_142 : f32 to vector<8x64xf32>
    %273 = arith.addf %271, %272 : vector<8x64xf32>
    %274 = arith.mulf %263, %241 : vector<8x64xf32>
    %275 = arith.mulf %255, %265 : vector<8x64xf32>
    %276 = arith.addf %274, %275 : vector<8x64xf32>
    %277 = math.tanh %276 : vector<8x64xf32>
    %278 = arith.mulf %273, %277 : vector<8x64xf32>
    %c0_143 = arith.constant 0 : index
    %c0_144 = arith.constant 0 : index
    %279 = vector.load %arg10[%c0_143, %c0_144] : memref<8x64xf32, #tpu.memory_space<vmem>>, vector<8x64xf32>
    tpu.vector_store %arg10[%c0_143, %c0_144], %276 {strides = array<i32>} : memref<8x64xf32, #tpu.memory_space<vmem>>, vector<8x64xf32>,
    %c0_145 = arith.constant 0 : index
    %c0_146 = arith.constant 0 : index
    %280 = vector.load %arg9[%c0_145, %c0_146] : memref<8x64xf32, #tpu.memory_space<vmem>>, vector<8x64xf32>
    tpu.vector_store %arg9[%c0_145, %c0_146], %278 {strides = array<i32>} : memref<8x64xf32, #tpu.memory_space<vmem>>, vector<8x64xf32>,
    %281 = arith.index_cast %c5_i32 : i32 to index
    %c0_147 = arith.constant 0 : index
    %c0_148 = arith.constant 0 : index
    %282 = vector.load %arg8[%281, %c0_147, %c0_148] : memref<8x8x64xf32, #tpu.memory_space<vmem>>, vector<1x8x64xf32>
    %283 = vector.shape_cast %282 : vector<1x8x64xf32> to vector<8x64xf32>
    %284 = vector.shape_cast %278 : vector<8x64xf32> to vector<1x8x64xf32>
    tpu.vector_store %arg8[%281, %c0_147, %c0_148], %284 {strides = array<i32>} : memref<8x8x64xf32, #tpu.memory_space<vmem>>, vector<1x8x64xf32>,
    %c6_i32 = arith.constant 6 : i32
    %c0_149 = arith.constant 0 : index
    %c0_150 = arith.constant 0 : index
    %285 = vector.load %arg9[%c0_149, %c0_150] : memref<8x64xf32, #tpu.memory_space<vmem>>, vector<8x64xf32>
    %c0_151 = arith.constant 0 : index
    %c0_152 = arith.constant 0 : index
    %286 = vector.load %arg10[%c0_151, %c0_152] : memref<8x64xf32, #tpu.memory_space<vmem>>, vector<8x64xf32>
    %287 = arith.index_cast %c6_i32 : i32 to index
    %c0_153 = arith.constant 0 : index
    %c0_154 = arith.constant 0 : index
    %288 = vector.load %arg7[%287, %c0_153, %c0_154] : memref<8x8x256xf32, #tpu.memory_space<vmem>>, vector<1x8x256xf32>
    %289 = vector.shape_cast %288 : vector<1x8x256xf32> to vector<8x256xf32>
    %290 = arith.truncf %285 : vector<8x64xf32> to vector<8x64xbf16>
    %cst_155 = arith.constant dense<0.000000e+00> : vector<8x256xf32>
    %291 = tpu.matmul %290, %14, %cst_155 {dimension_numbers = #tpu.dot_dimension_numbers<[1], [0], [0], [1], [0, 0, 1, 1], [], []>} : vector<8x64xbf16>, vector<64x256xbf16>, vector<8x256xf32> -> vector<8x256xf32>
    %292 = arith.addf %289, %291 : vector<8x256xf32>
    %293 = vector.extract_strided_slice %292 {offsets = [0, 0], sizes = [8, 64], strides = [1, 1]} : vector<8x256xf32> to vector<8x64xf32>
    %cst_156 = arith.constant 5.000000e-01 : f32
    %294 = vector.broadcast %cst_156 : f32 to vector<8x64xf32>
    %295 = arith.mulf %294, %293 : vector<8x64xf32>
    %296 = math.tanh %295 : vector<8x64xf32>
    %cst_157 = arith.constant 5.000000e-01 : f32
    %297 = vector.broadcast %cst_157 : f32 to vector<8x64xf32>
    %298 = arith.mulf %297, %296 : vector<8x64xf32>
    %cst_158 = arith.constant 5.000000e-01 : f32
    %299 = vector.broadcast %cst_158 : f32 to vector<8x64xf32>
    %300 = arith.addf %298, %299 : vector<8x64xf32>
    %301 = vector.extract_strided_slice %292 {offsets = [0, 64], sizes = [8, 64], strides = [1, 1]} : vector<8x256xf32> to vector<8x64xf32>
    %cst_159 = arith.constant 5.000000e-01 : f32
    %302 = vector.broadcast %cst_159 : f32 to vector<8x64xf32>
    %303 = arith.mulf %302, %301 : vector<8x64xf32>
    %304 = math.tanh %303 : vector<8x64xf32>
    %cst_160 = arith.constant 5.000000e-01 : f32
    %305 = vector.broadcast %cst_160 : f32 to vector<8x64xf32>
    %306 = arith.mulf %305, %304 : vector<8x64xf32>
    %cst_161 = arith.constant 5.000000e-01 : f32
    %307 = vector.broadcast %cst_161 : f32 to vector<8x64xf32>
    %308 = arith.addf %306, %307 : vector<8x64xf32>
    %309 = vector.extract_strided_slice %292 {offsets = [0, 128], sizes = [8, 64], strides = [1, 1]} : vector<8x256xf32> to vector<8x64xf32>
    %310 = math.tanh %309 : vector<8x64xf32>
    %311 = vector.extract_strided_slice %292 {offsets = [0, 192], sizes = [8, 64], strides = [1, 1]} : vector<8x256xf32> to vector<8x64xf32>
    %cst_162 = arith.constant 5.000000e-01 : f32
    %312 = vector.broadcast %cst_162 : f32 to vector<8x64xf32>
    %313 = arith.mulf %312, %311 : vector<8x64xf32>
    %314 = math.tanh %313 : vector<8x64xf32>
    %cst_163 = arith.constant 5.000000e-01 : f32
    %315 = vector.broadcast %cst_163 : f32 to vector<8x64xf32>
    %316 = arith.mulf %315, %314 : vector<8x64xf32>
    %cst_164 = arith.constant 5.000000e-01 : f32
    %317 = vector.broadcast %cst_164 : f32 to vector<8x64xf32>
    %318 = arith.addf %316, %317 : vector<8x64xf32>
    %319 = arith.mulf %308, %286 : vector<8x64xf32>
    %320 = arith.mulf %300, %310 : vector<8x64xf32>
    %321 = arith.addf %319, %320 : vector<8x64xf32>
    %322 = math.tanh %321 : vector<8x64xf32>
    %323 = arith.mulf %318, %322 : vector<8x64xf32>
    %c0_165 = arith.constant 0 : index
    %c0_166 = arith.constant 0 : index
    %324 = vector.load %arg10[%c0_165, %c0_166] : memref<8x64xf32, #tpu.memory_space<vmem>>, vector<8x64xf32>
    tpu.vector_store %arg10[%c0_165, %c0_166], %321 {strides = array<i32>} : memref<8x64xf32, #tpu.memory_space<vmem>>, vector<8x64xf32>,
    %c0_167 = arith.constant 0 : index
    %c0_168 = arith.constant 0 : index
    %325 = vector.load %arg9[%c0_167, %c0_168] : memref<8x64xf32, #tpu.memory_space<vmem>>, vector<8x64xf32>
    tpu.vector_store %arg9[%c0_167, %c0_168], %323 {strides = array<i32>} : memref<8x64xf32, #tpu.memory_space<vmem>>, vector<8x64xf32>,
    %326 = arith.index_cast %c6_i32 : i32 to index
    %c0_169 = arith.constant 0 : index
    %c0_170 = arith.constant 0 : index
    %327 = vector.load %arg8[%326, %c0_169, %c0_170] : memref<8x8x64xf32, #tpu.memory_space<vmem>>, vector<1x8x64xf32>
    %328 = vector.shape_cast %327 : vector<1x8x64xf32> to vector<8x64xf32>
    %329 = vector.shape_cast %323 : vector<8x64xf32> to vector<1x8x64xf32>
    tpu.vector_store %arg8[%326, %c0_169, %c0_170], %329 {strides = array<i32>} : memref<8x8x64xf32, #tpu.memory_space<vmem>>, vector<1x8x64xf32>,
    %c7_i32 = arith.constant 7 : i32
    %c0_171 = arith.constant 0 : index
    %c0_172 = arith.constant 0 : index
    %330 = vector.load %arg9[%c0_171, %c0_172] : memref<8x64xf32, #tpu.memory_space<vmem>>, vector<8x64xf32>
    %c0_173 = arith.constant 0 : index
    %c0_174 = arith.constant 0 : index
    %331 = vector.load %arg10[%c0_173, %c0_174] : memref<8x64xf32, #tpu.memory_space<vmem>>, vector<8x64xf32>
    %332 = arith.index_cast %c7_i32 : i32 to index
    %c0_175 = arith.constant 0 : index
    %c0_176 = arith.constant 0 : index
    %333 = vector.load %arg7[%332, %c0_175, %c0_176] : memref<8x8x256xf32, #tpu.memory_space<vmem>>, vector<1x8x256xf32>
    %334 = vector.shape_cast %333 : vector<1x8x256xf32> to vector<8x256xf32>
    %335 = arith.truncf %330 : vector<8x64xf32> to vector<8x64xbf16>
    %cst_177 = arith.constant dense<0.000000e+00> : vector<8x256xf32>
    %336 = tpu.matmul %335, %14, %cst_177 {dimension_numbers = #tpu.dot_dimension_numbers<[1], [0], [0], [1], [0, 0, 1, 1], [], []>} : vector<8x64xbf16>, vector<64x256xbf16>, vector<8x256xf32> -> vector<8x256xf32>
    %337 = arith.addf %334, %336 : vector<8x256xf32>
    %338 = vector.extract_strided_slice %337 {offsets = [0, 0], sizes = [8, 64], strides = [1, 1]} : vector<8x256xf32> to vector<8x64xf32>
    %cst_178 = arith.constant 5.000000e-01 : f32
    %339 = vector.broadcast %cst_178 : f32 to vector<8x64xf32>
    %340 = arith.mulf %339, %338 : vector<8x64xf32>
    %341 = math.tanh %340 : vector<8x64xf32>
    %cst_179 = arith.constant 5.000000e-01 : f32
    %342 = vector.broadcast %cst_179 : f32 to vector<8x64xf32>
    %343 = arith.mulf %342, %341 : vector<8x64xf32>
    %cst_180 = arith.constant 5.000000e-01 : f32
    %344 = vector.broadcast %cst_180 : f32 to vector<8x64xf32>
    %345 = arith.addf %343, %344 : vector<8x64xf32>
    %346 = vector.extract_strided_slice %337 {offsets = [0, 64], sizes = [8, 64], strides = [1, 1]} : vector<8x256xf32> to vector<8x64xf32>
    %cst_181 = arith.constant 5.000000e-01 : f32
    %347 = vector.broadcast %cst_181 : f32 to vector<8x64xf32>
    %348 = arith.mulf %347, %346 : vector<8x64xf32>
    %349 = math.tanh %348 : vector<8x64xf32>
    %cst_182 = arith.constant 5.000000e-01 : f32
    %350 = vector.broadcast %cst_182 : f32 to vector<8x64xf32>
    %351 = arith.mulf %350, %349 : vector<8x64xf32>
    %cst_183 = arith.constant 5.000000e-01 : f32
    %352 = vector.broadcast %cst_183 : f32 to vector<8x64xf32>
    %353 = arith.addf %351, %352 : vector<8x64xf32>
    %354 = vector.extract_strided_slice %337 {offsets = [0, 128], sizes = [8, 64], strides = [1, 1]} : vector<8x256xf32> to vector<8x64xf32>
    %355 = math.tanh %354 : vector<8x64xf32>
    %356 = vector.extract_strided_slice %337 {offsets = [0, 192], sizes = [8, 64], strides = [1, 1]} : vector<8x256xf32> to vector<8x64xf32>
    %cst_184 = arith.constant 5.000000e-01 : f32
    %357 = vector.broadcast %cst_184 : f32 to vector<8x64xf32>
    %358 = arith.mulf %357, %356 : vector<8x64xf32>
    %359 = math.tanh %358 : vector<8x64xf32>
    %cst_185 = arith.constant 5.000000e-01 : f32
    %360 = vector.broadcast %cst_185 : f32 to vector<8x64xf32>
    %361 = arith.mulf %360, %359 : vector<8x64xf32>
    %cst_186 = arith.constant 5.000000e-01 : f32
    %362 = vector.broadcast %cst_186 : f32 to vector<8x64xf32>
    %363 = arith.addf %361, %362 : vector<8x64xf32>
    %364 = arith.mulf %353, %331 : vector<8x64xf32>
    %365 = arith.mulf %345, %355 : vector<8x64xf32>
    %366 = arith.addf %364, %365 : vector<8x64xf32>
    %367 = math.tanh %366 : vector<8x64xf32>
    %368 = arith.mulf %363, %367 : vector<8x64xf32>
    %c0_187 = arith.constant 0 : index
    %c0_188 = arith.constant 0 : index
    %369 = vector.load %arg10[%c0_187, %c0_188] : memref<8x64xf32, #tpu.memory_space<vmem>>, vector<8x64xf32>
    tpu.vector_store %arg10[%c0_187, %c0_188], %366 {strides = array<i32>} : memref<8x64xf32, #tpu.memory_space<vmem>>, vector<8x64xf32>,
    %c0_189 = arith.constant 0 : index
    %c0_190 = arith.constant 0 : index
    %370 = vector.load %arg9[%c0_189, %c0_190] : memref<8x64xf32, #tpu.memory_space<vmem>>, vector<8x64xf32>
    tpu.vector_store %arg9[%c0_189, %c0_190], %368 {strides = array<i32>} : memref<8x64xf32, #tpu.memory_space<vmem>>, vector<8x64xf32>,
    %371 = arith.index_cast %c7_i32 : i32 to index
    %c0_191 = arith.constant 0 : index
    %c0_192 = arith.constant 0 : index
    %372 = vector.load %arg8[%371, %c0_191, %c0_192] : memref<8x8x64xf32, #tpu.memory_space<vmem>>, vector<1x8x64xf32>
    %373 = vector.shape_cast %372 : vector<1x8x64xf32> to vector<8x64xf32>
    %374 = vector.shape_cast %368 : vector<8x64xf32> to vector<1x8x64xf32>
    tpu.vector_store %arg8[%371, %c0_191, %c0_192], %374 {strides = array<i32>} : memref<8x8x64xf32, #tpu.memory_space<vmem>>, vector<1x8x64xf32>,
    %c8_i32 = arith.constant 8 : i32
    %c0_193 = arith.constant 0 : index
    %c0_194 = arith.constant 0 : index
    %c0_195 = arith.constant 0 : index
    %375 = vector.load %arg8[%c0_193, %c0_194, %c0_195] : memref<8x8x64xf32, #tpu.memory_space<vmem>>, vector<8x8x64xf32>
    %376 = tpu.transpose %375, [1, 0, 2] : vector<8x8x64xf32> -> vector<8x8x64xf32>
    %c0_196 = arith.constant 0 : index
    %c0_197 = arith.constant 0 : index
    %c0_198 = arith.constant 0 : index
    %c0_199 = arith.constant 0 : index
    %377 = vector.load %arg5[%c0_196, %c0_197, %c0_198, %c0_199] : memref<8x4x6x64xf32, #tpu.memory_space<vmem>>, vector<8x4x6x64xf32>
    %cst_200 = arith.constant dense<0.000000e+00> : vector<8x4x64xf32>
    %378 = vector.multi_reduction <add>, %377, %cst_200 [2] : vector<8x4x6x64xf32> to vector<8x4x64xf32>
    %cst_201 = arith.constant 0.166666672 : f32
    %379 = vector.broadcast %cst_201 : f32 to vector<8x4x64xf32>
    %380 = arith.mulf %378, %379 : vector<8x4x64xf32>
    %381 = arith.truncf %376 : vector<8x8x64xf32> to vector<8x8x64xbf16>
    %382 = arith.truncf %380 : vector<8x4x64xf32> to vector<8x4x64xbf16>
    "tpu.trace_start"() <{level = 10 : i32, message = "bth,bch->btc"}> : () -> ()
    %cst_202 = arith.constant dense<0.000000e+00> : vector<8x8x4xf32>
    %383 = tpu.matmul %381, %382, %cst_202 {dimension_numbers = #tpu.dot_dimension_numbers<[2], [2], [1], [1], [0, 0, 0, 1, 1, 1], [0], [0]>} : vector<8x8x64xbf16>, vector<8x4x64xbf16>, vector<8x8x4xf32> -> vector<8x8x4xf32>
    "tpu.trace_stop"() : () -> ()
    %cst_203 = arith.constant dense<0xFF800000> : vector<8x8xf32>
    %384 = vector.multi_reduction <maximumf>, %383, %cst_203 [2] : vector<8x8x4xf32> to vector<8x8xf32>
    %385 = vector.shape_cast %384 : vector<8x8xf32> to vector<8x8x1xf32>
    %386 = vector.broadcast %385 : vector<8x8x1xf32> to vector<8x8x4xf32>
    %387 = arith.subf %383, %386 : vector<8x8x4xf32>
    %388 = math.exp %387 : vector<8x8x4xf32>
    %cst_204 = arith.constant dense<0.000000e+00> : vector<8x8xf32>
    %389 = vector.multi_reduction <add>, %388, %cst_204 [2] : vector<8x8x4xf32> to vector<8x8xf32>
    %390 = vector.shape_cast %389 : vector<8x8xf32> to vector<8x8x1xf32>
    %391 = tpu.reciprocal %390 {approx = true} : vector<8x8x1xf32> -> vector<8x8x1xf32>
    %392 = vector.broadcast %391 : vector<8x8x1xf32> to vector<8x8x4xf32>
    %393 = arith.mulf %388, %392 : vector<8x8x4xf32>
    %394 = arith.truncf %393 : vector<8x8x4xf32> to vector<8x8x4xbf16>
    %395 = arith.truncf %380 : vector<8x4x64xf32> to vector<8x4x64xbf16>
    "tpu.trace_start"() <{level = 10 : i32, message = "btc,bce->bte"}> : () -> ()
    %cst_205 = arith.constant dense<0.000000e+00> : vector<8x8x64xf32>
    %396 = tpu.matmul %394, %395, %cst_205 {dimension_numbers = #tpu.dot_dimension_numbers<[2], [1], [1], [2], [0, 0, 0, 1, 1, 2], [0], [0]>} : vector<8x8x4xbf16>, vector<8x4x64xbf16>, vector<8x8x64xf32> -> vector<8x8x64xf32>
    "tpu.trace_stop"() : () -> ()
    %397 = tpu.concatenate %376, %396 in 2 : vector<8x8x64xf32>, vector<8x8x64xf32> -> vector<8x8x128xf32>
    %c0_206 = arith.constant 0 : index
    %c0_207 = arith.constant 0 : index
    %c0_208 = arith.constant 0 : index
    %398 = vector.load %arg6[%c0_206, %c0_207, %c0_208] : memref<8x8x128xf32, #tpu.memory_space<vmem>>, vector<8x8x128xf32>
    tpu.vector_store %arg6[%c0_206, %c0_207, %c0_208], %397 {strides = array<i32>} : memref<8x8x128xf32, #tpu.memory_space<vmem>>, vector<8x8x128xf32>,
    return
  }
  func.func @transform_0(%arg0: i32) -> (i32, i32, i32) {
    %c0_i32 = arith.constant 0 : i32
    %c0_i32_0 = arith.constant 0 : i32
    %c0_i32_1 = arith.constant 0 : i32
    return %c0_i32, %arg0, %c0_i32_0 : i32, i32, i32
  }
  func.func @transform_1(%arg0: i32) -> (i32, i32) {
    %c0_i32 = arith.constant 0 : i32
    %c0_i32_0 = arith.constant 0 : i32
    %c0_i32_1 = arith.constant 0 : i32
    return %c0_i32, %c0_i32_0 : i32, i32
  }
  func.func @transform_2(%arg0: i32) -> (i32, i32) {
    %c0_i32 = arith.constant 0 : i32
    %c0_i32_0 = arith.constant 0 : i32
    %c0_i32_1 = arith.constant 0 : i32
    return %c0_i32, %c0_i32_0 : i32, i32
  }
  func.func @transform_3(%arg0: i32) -> (i32, i32) {
    %c0_i32 = arith.constant 0 : i32
    %c0_i32_0 = arith.constant 0 : i32
    %c0_i32_1 = arith.constant 0 : i32
    return %c0_i32, %c0_i32_0 : i32, i32
  }
  func.func @transform_4(%arg0: i32) -> (i32, i32, i32, i32) {
    %c0_i32 = arith.constant 0 : i32
    %c0_i32_0 = arith.constant 0 : i32
    %c0_i32_1 = arith.constant 0 : i32
    %c0_i32_2 = arith.constant 0 : i32
    return %arg0, %c0_i32, %c0_i32_0, %c0_i32_1 : i32, i32, i32, i32
  }
  func.func @transform_5(%arg0: i32) -> (i32, i32, i32) {
    %c0_i32 = arith.constant 0 : i32
    %c0_i32_0 = arith.constant 0 : i32
    %c0_i32_1 = arith.constant 0 : i32
    return %arg0, %c0_i32, %c0_i32_0 : i32, i32, i32
  }
}

</mosaic_0001>

<llo_original>
// kernel: lstm2seq_attn_context_forward.1
$region0: #{lstm2seq_attn_context_forward.1}
  #allocation0 [shape = 'u32[]', space=smem, size = 0x4, offset = 0x4, fixed_abs, tag = 'smem constant byte address 0x4 - core index']
  #allocation1 [shape = 'u32[72,128]{1,0:T(1,128)}', space=vmem, size = 0x9000, scoped, tag = 'internal scratch']
  #allocation2 [shape = 'f32[8,8,256]{2,1,0:T(8,128)}', space=vmem, size = 0x10000, scoped, tag = 'scratch operand']
  #allocation3 [shape = 'f32[8,8,64]{2,1,0:T(8,128)}', space=vmem, size = 0x8000, scoped, tag = 'scratch operand']
  #allocation4 [shape = 'f32[8,64]{1,0:T(8,128)}', space=vmem, size = 0x1000, scoped, tag = 'scratch operand']
  #allocation5 [shape = 'f32[8,64]{1,0:T(8,128)}', space=vmem, size = 0x1000, scoped, tag = 'scratch operand']
  %s0 = inlined_call_operand.vmem [shape: f32[8,8,64], index: 0, kind: input, shape index: {}]
  %s1 = inlined_call_operand.vmem [shape: bf16[64,256], index: 1, kind: input, shape index: {}]
  %s2 = inlined_call_operand.vmem [shape: bf16[64,256], index: 2, kind: input, shape index: {}]
  %s3 = inlined_call_operand.vmem [shape: f32[1,256], index: 3, kind: input, shape index: {}]
  %s4 = inlined_call_operand.vmem [shape: f32[8,4,6,64], index: 4, kind: input, shape index: {}]
  %s5 = inlined_call_operand.vmem [shape: f32[8,8,128], index: 5, kind: output, shape index: {}]
  %s6 = sld [smem:[#allocation0]]
  $region30: #{lstm2seq_attn_context_forward.1} parent=0
    _
  %s8 = ssub.s32 1, %s6
  %s9 = scalar_select 0, %s8, %s6
  // Predicated region
  $region2: #{lstm2seq_attn_context_forward.1} parent=0 // pred_check
    _
  $region3: #{lstm2seq_attn_context_forward.1} parent=0 // pred_check_branch
    %11 = sbr.rel (0) target = $region5
  $region4: #{lstm2seq_attn_context_forward.1} parent=0 // pred_region
    _
  $region5: #{lstm2seq_attn_context_forward.1} parent=0 // pred_fallthru
    _
  // Predicated region
  $region6: #{lstm2seq_attn_context_forward.1} parent=0 // pred_check
    _
  $region7: #{lstm2seq_attn_context_forward.1} parent=0 // pred_check_branch
    %13 = sbr.rel (0) target = $region9
  $region8: #{lstm2seq_attn_context_forward.1} parent=0 // pred_region
    _
  $region9: #{lstm2seq_attn_context_forward.1} parent=0 // pred_fallthru
    _
  // Predicated region
  $region10: #{lstm2seq_attn_context_forward.1} parent=0 // pred_check
    _
  $region11: #{lstm2seq_attn_context_forward.1} parent=0 // pred_check_branch
    %15 = sbr.rel (0) target = $region13
  $region12: #{lstm2seq_attn_context_forward.1} parent=0 // pred_region
    _
  $region13: #{lstm2seq_attn_context_forward.1} parent=0 // pred_fallthru
    _
  // Predicated region
  $region14: #{lstm2seq_attn_context_forward.1} parent=0 // pred_check
    _
  $region15: #{lstm2seq_attn_context_forward.1} parent=0 // pred_check_branch
    %17 = sbr.rel (0) target = $region17
  $region16: #{lstm2seq_attn_context_forward.1} parent=0 // pred_region
    _
  $region17: #{lstm2seq_attn_context_forward.1} parent=0 // pred_fallthru
    _
  // Predicated region
  $region18: #{lstm2seq_attn_context_forward.1} parent=0 // pred_check
    _
  $region19: #{lstm2seq_attn_context_forward.1} parent=0 // pred_check_branch
    %19 = sbr.rel (0) target = $region21
  $region20: #{lstm2seq_attn_context_forward.1} parent=0 // pred_region
    _
  $region21: #{lstm2seq_attn_context_forward.1} parent=0 // pred_fallthru
    _
  %v21 = vld [vmem:[%s0] sm:$0xff]
  %v22 = vld [vmem:[%s0 + $0x8] sm:$0xff]
  %v23 = vld [vmem:[%s0 + $0x10] sm:$0xff]
  %v24 = vld [vmem:[%s0 + $0x18] sm:$0xff]
  %v25 = vld [vmem:[%s0 + $0x20] sm:$0xff]
  %v26 = vld [vmem:[%s0 + $0x28] sm:$0xff]
  %v27 = vld [vmem:[%s0 + $0x30] sm:$0xff]
  %v28 = vld [vmem:[%s0 + $0x38] sm:$0xff]
  %v29 = vpack.c.bf16 %v22, %v21
  %v30 = vpack.c.bf16 %v24, %v23
  %v31 = vpack.c.bf16 %v26, %v25
  %v32 = vpack.c.bf16 %v28, %v27
  %v33 = vld [vmem:[%s1] sm:$0xff]
  %v34 = vld [vmem:[%s1 + $0x8] sm:$0xff]
  %v35 = vld [vmem:[%s1 + $0x10] sm:$0xff]
  %v36 = vld [vmem:[%s1 + $0x18] sm:$0xff]
  %v37 = vld [vmem:[%s1 + $0x20] sm:$0xff]
  %v38 = vld [vmem:[%s1 + $0x28] sm:$0xff]
  %v39 = vld [vmem:[%s1 + $0x30] sm:$0xff]
  %v40 = vld [vmem:[%s1 + $0x38] sm:$0xff]
  %v41 = vld [vmem:[%s3] sm:$0x3]
  %v43 = vperm.slane %v41, 0
  %v44 = vperm.slane %v41, 1
  %v55 = vunpack.c.l.b16 %v33
  %v56 = vunpack.c.h.b16 %v33
  %v57 = vunpack.c.l.b16 %v34
  %v58 = vunpack.c.h.b16 %v34
  %v59 = vunpack.c.l.b16 %v35
  %v60 = vunpack.c.h.b16 %v35
  %v61 = vunpack.c.l.b16 %v36
  %v62 = vunpack.c.h.b16 %v36
  %v63 = vunpack.c.l.b16 %v37
  %v64 = vunpack.c.h.b16 %v37
  %v65 = vunpack.c.l.b16 %v38
  %v66 = vunpack.c.h.b16 %v38
  %v67 = vunpack.c.l.b16 %v39
  %v68 = vunpack.c.h.b16 %v39
  %v69 = vunpack.c.l.b16 %v40
  %v70 = vunpack.c.h.b16 %v40
  %v71 = vpack.c.b16 %v57, %v55
  %v72 = vpack.c.b16 %v58, %v56
  %v73 = vpack.c.b16 %v61, %v59
  %v74 = vpack.c.b16 %v62, %v60
  %v75 = vpack.c.b16 %v65, %v63
  %v76 = vpack.c.b16 %v66, %v64
  %v77 = vpack.c.b16 %v69, %v67
  %v78 = vpack.c.b16 %v70, %v68
  %vm87 = vcmask 523264
  %v89 = vsel %vm87, %v29, 0
  %v92 = vsel %vm87, %v30, 0
  %v95 = vsel %vm87, %v31, 0
  %v98 = vsel %vm87, %v32, 0
  %100 = vmatpush.bf16.msra.mxu0 0
  %101 = vmatpush.bf16.msra.mxu0 0
  %102 = vmatpush.bf16.msra.mxu0 0
  %103 = vmatpush.bf16.msra.mxu0 0
  %104 = vmatpush.bf16.msra.mxu0 %v77
  %105 = vmatpush.bf16.msra.mxu0 %v75
  %106 = vmatpush.bf16.msra.mxu0 %v73
  %107 = vmatpush.bf16.msra.mxu0 %v71
  %108 = vmatmul.bf16.gmra.mxu0 %v89
  %v109 = vpop.f32.mrf.mxu0
  %v110 = vadd.f32 %v43, %v109
  %v111 = vpop.f32.mrf.mxu0
  %v112 = vadd.f32 %v43, %v111
  %113 = vmatmul.bf16.gmra.mxu0 %v92
  %v114 = vpop.f32.mrf.mxu0
  %v115 = vadd.f32 %v43, %v114
  %v116 = vpop.f32.mrf.mxu0
  %v117 = vadd.f32 %v43, %v116
  %118 = vmatmul.bf16.gmra.mxu0 %v95
  %v119 = vpop.f32.mrf.mxu0
  %v120 = vadd.f32 %v43, %v119
  %v121 = vpop.f32.mrf.mxu0
  %v122 = vadd.f32 %v43, %v121
  %123 = vmatmul.bf16.gmra.mxu0 %v98
  %v124 = vpop.f32.mrf.mxu0
  %v125 = vadd.f32 %v43, %v124
  %v126 = vpop.f32.mrf.mxu0
  %v127 = vadd.f32 %v43, %v126
  %128 = vdwg.mxu0
  %129 = vmatpush.bf16.msra.mxu0 0
  %130 = vmatpush.bf16.msra.mxu0 0
  %131 = vmatpush.bf16.msra.mxu0 0
  %132 = vmatpush.bf16.msra.mxu0 0
  %133 = vmatpush.bf16.msra.mxu0 %v78
  %134 = vmatpush.bf16.msra.mxu0 %v76
  %135 = vmatpush.bf16.msra.mxu0 %v74
  %136 = vmatpush.bf16.msra.mxu0 %v72
  %137 = vmatmul.bf16.gmra.mxu0 %v89
  %v138 = vpop.f32.mrf.mxu0
  %v139 = vadd.f32 %v44, %v138
  %v140 = vpop.f32.mrf.mxu0
  %v141 = vadd.f32 %v44, %v140
  %142 = vmatmul.bf16.gmra.mxu0 %v92
  %v143 = vpop.f32.mrf.mxu0
  %v144 = vadd.f32 %v44, %v143
  %v145 = vpop.f32.mrf.mxu0
  %v146 = vadd.f32 %v44, %v145
  %147 = vmatmul.bf16.gmra.mxu0 %v95
  %v148 = vpop.f32.mrf.mxu0
  %v149 = vadd.f32 %v44, %v148
  %v150 = vpop.f32.mrf.mxu0
  %v151 = vadd.f32 %v44, %v150
  %152 = vmatmul.bf16.gmra.mxu0 %v98
  %v153 = vpop.f32.mrf.mxu0
  %v154 = vadd.f32 %v44, %v153
  %v155 = vpop.f32.mrf.mxu0
  %v156 = vadd.f32 %v44, %v155
  %157 = vdwg.mxu0
  %158 = vst [vmem:[#allocation2] sm:$0xff] %v110
  %159 = vst [vmem:[#allocation2 + $0x8] sm:$0xff] %v139
  %160 = vst [vmem:[#allocation2 + $0x10] sm:$0xff] %v112
  %161 = vst [vmem:[#allocation2 + $0x18] sm:$0xff] %v141
  %162 = vst [vmem:[#allocation2 + $0x20] sm:$0xff] %v115
  %163 = vst [vmem:[#allocation2 + $0x28] sm:$0xff] %v144
  %164 = vst [vmem:[#allocation2 + $0x30] sm:$0xff] %v117
  %165 = vst [vmem:[#allocation2 + $0x38] sm:$0xff] %v146
  %166 = vst [vmem:[#allocation2 + $0x40] sm:$0xff] %v120
  %167 = vst [vmem:[#allocation2 + $0x48] sm:$0xff] %v149
  %168 = vst [vmem:[#allocation2 + $0x50] sm:$0xff] %v122
  %169 = vst [vmem:[#allocation2 + $0x58] sm:$0xff] %v151
  %170 = vst [vmem:[#allocation2 + $0x60] sm:$0xff] %v125
  %171 = vst [vmem:[#allocation2 + $0x68] sm:$0xff] %v154
  %172 = vst [vmem:[#allocation2 + $0x70] sm:$0xff] %v127
  %173 = vst [vmem:[#allocation2 + $0x78] sm:$0xff] %v156
  %174 = vst.msk [vmem:[#allocation4] sm:$0xff] %vm87, 0.0
  %175 = vst.msk [vmem:[#allocation5] sm:$0xff] %vm87, 0.0
  %v176 = vld [vmem:[%s2] sm:$0xff]
  %v177 = vld [vmem:[%s2 + $0x8] sm:$0xff]
  %v178 = vld [vmem:[%s2 + $0x10] sm:$0xff]
  %v179 = vld [vmem:[%s2 + $0x18] sm:$0xff]
  %v180 = vld [vmem:[%s2 + $0x20] sm:$0xff]
  %v181 = vld [vmem:[%s2 + $0x28] sm:$0xff]
  %v182 = vld [vmem:[%s2 + $0x30] sm:$0xff]
  %v183 = vld [vmem:[%s2 + $0x38] sm:$0xff]
  %v184 = vld [vmem:[#allocation4] sm:$0xff]
  %v185 = vld [vmem:[#allocation5] sm:$0xff]
  %v186 = vld [vmem:[#allocation2] sm:$0xff]
  %v187 = vld [vmem:[#allocation2 + $0x8] sm:$0xff]
  %v188 = vpack.c.bf16 %v184, %v184
  %v197 = vunpack.c.l.b16 %v176
  %v198 = vunpack.c.h.b16 %v176
  %v199 = vunpack.c.l.b16 %v177
  %v200 = vunpack.c.h.b16 %v177
  %v201 = vunpack.c.l.b16 %v178
  %v202 = vunpack.c.h.b16 %v178
  %v203 = vunpack.c.l.b16 %v179
  %v204 = vunpack.c.h.b16 %v179
  %v205 = vunpack.c.l.b16 %v180
  %v206 = vunpack.c.h.b16 %v180
  %v207 = vunpack.c.l.b16 %v181
  %v208 = vunpack.c.h.b16 %v181
  %v209 = vunpack.c.l.b16 %v182
  %v210 = vunpack.c.h.b16 %v182
  %v211 = vunpack.c.l.b16 %v183
  %v212 = vunpack.c.h.b16 %v183
  %v213 = vpack.c.b16 %v199, %v197
  %v214 = vpack.c.b16 %v200, %v198
  %v215 = vpack.c.b16 %v203, %v201
  %v216 = vpack.c.b16 %v204, %v202
  %v217 = vpack.c.b16 %v207, %v205
  %v218 = vpack.c.b16 %v208, %v206
  %v219 = vpack.c.b16 %v211, %v209
  %v220 = vpack.c.b16 %v212, %v210
  %v230 = vsel %vm87, %v188, 0
  %232 = vmatpush.bf16.msra.mxu0 0
  %233 = vmatpush.bf16.msra.mxu0 0
  %234 = vmatpush.bf16.msra.mxu0 0
  %235 = vmatpush.bf16.msra.mxu0 0
  %236 = vmatpush.bf16.msra.mxu0 %v219
  %237 = vmatpush.bf16.msra.mxu0 %v217
  %238 = vmatpush.bf16.msra.mxu0 %v215
  %239 = vmatpush.bf16.msra.mxu0 %v213
  %240 = vmatmul.bf16.gmra.mxu0 %v230
  %v241 = vpop.f32.mrf.mxu0
  %v242 = vadd.f32 0.0, %v241
  %v243 = vpop.f32.mrf.mxu0
  %244 = vdwg.mxu0
  %245 = vmatpush.bf16.msra.mxu0 0
  %246 = vmatpush.bf16.msra.mxu0 0
  %247 = vmatpush.bf16.msra.mxu0 0
  %248 = vmatpush.bf16.msra.mxu0 0
  %249 = vmatpush.bf16.msra.mxu0 %v220
  %250 = vmatpush.bf16.msra.mxu0 %v218
  %251 = vmatpush.bf16.msra.mxu0 %v216
  %252 = vmatpush.bf16.msra.mxu0 %v214
  %253 = vmatmul.bf16.gmra.mxu0 %v230
  %v254 = vpop.f32.mrf.mxu0
  %v255 = vadd.f32 0.0, %v254
  %v256 = vpop.f32.mrf.mxu0
  %257 = vdwg.mxu0
  %v258 = vadd.f32 %v186, %v242
  %v259 = vadd.f32 %v187, %v255
  %v260 = vmul.f32 %v258, 0.5
  %v261 = vtanh.pop %v260
  %v262 = vmul.f32 %v261, 0.5
  %v263 = vadd.f32 %v262, 0.5
  %v264 = vtanh.pop %v259
  %v265 = vmul.f32 %v259, 0.5
  %v266 = vtanh.pop %v265
  %v267 = vmul.f32 %v266, 0.5
  %v268 = vadd.f32 %v267, 0.5
  %270 = vrot.lane.b32.xlu0 %v185, 64
  %v271 = vpop.permute.xlu0 %270
  %v273 = vmul.f32 %v263, %v271
  %v274 = vmul.f32 %v263, %v264
  %276 = vrot.lane.b32.xlu0 %v274, 64
  %v277 = vpop.permute.xlu0 %276
  %v279 = vadd.f32 %v273, %v277
  %v280 = vtanh.pop %v279
  %v281 = vmul.f32 %v268, %v280
  %283 = vrot.lane.b32.xlu0 %v279, 64
  %v284 = vpop.permute.xlu0 %283
  %286 = vst.msk [vmem:[#allocation5] sm:$0xff] %vm87, %v284
  %288 = vrot.lane.b32.xlu0 %v281, 64
  %v289 = vpop.permute.xlu0 %288
  %291 = vst.msk [vmem:[#allocation4] sm:$0xff] %vm87, %v289
  %292 = vst.msk [vmem:[#allocation3] sm:$0xff] %vm87, %v289
  %v293 = vld [vmem:[#allocation4] sm:$0xff]
  %v294 = vld [vmem:[#allocation5] sm:$0xff]
  %s295 = scalar_lea.vmem [#allocation2], 16
  %v296 = vld [vmem:[%s295] sm:$0xff]
  %v297 = vld [vmem:[%s295 + $0x8] sm:$0xff]
  %v298 = vpack.c.bf16 %v293, %v293
  %v300 = vsel %vm87, %v298, 0
  %302 = vmatpush.bf16.msra.mxu0 0
  %303 = vmatpush.bf16.msra.mxu0 0
  %304 = vmatpush.bf16.msra.mxu0 0
  %305 = vmatpush.bf16.msra.mxu0 0
  %306 = vmatpush.bf16.msra.mxu0 %v219
  %307 = vmatpush.bf16.msra.mxu0 %v217
  %308 = vmatpush.bf16.msra.mxu0 %v215
  %309 = vmatpush.bf16.msra.mxu0 %v213
  %310 = vmatmul.bf16.gmra.mxu0 %v300
  %v311 = vpop.f32.mrf.mxu0
  %v312 = vadd.f32 0.0, %v311
  %v313 = vpop.f32.mrf.mxu0
  %314 = vdwg.mxu0
  %315 = vmatpush.bf16.msra.mxu0 0
  %316 = vmatpush.bf16.msra.mxu0 0
  %317 = vmatpush.bf16.msra.mxu0 0
  %318 = vmatpush.bf16.msra.mxu0 0
  %319 = vmatpush.bf16.msra.mxu0 %v220
  %320 = vmatpush.bf16.msra.mxu0 %v218
  %321 = vmatpush.bf16.msra.mxu0 %v216
  %322 = vmatpush.bf16.msra.mxu0 %v214
  %323 = vmatmul.bf16.gmra.mxu0 %v300
  %v324 = vpop.f32.mrf.mxu0
  %v325 = vadd.f32 0.0, %v324
  %v326 = vpop.f32.mrf.mxu0
  %327 = vdwg.mxu0
  %v328 = vadd.f32 %v296, %v312
  %v329 = vadd.f32 %v297, %v325
  %v330 = vmul.f32 %v328, 0.5
  %v331 = vtanh.pop %v330
  %v332 = vmul.f32 %v331, 0.5
  %v333 = vadd.f32 %v332, 0.5
  %v334 = vtanh.pop %v329
  %v335 = vmul.f32 %v329, 0.5
  %v336 = vtanh.pop %v335
  %v337 = vmul.f32 %v336, 0.5
  %v338 = vadd.f32 %v337, 0.5
  %340 = vrot.lane.b32.xlu0 %v294, 64
  %v341 = vpop.permute.xlu0 %340
  %v343 = vmul.f32 %v333, %v341
  %v344 = vmul.f32 %v333, %v334
  %346 = vrot.lane.b32.xlu0 %v344, 64
  %v347 = vpop.permute.xlu0 %346
  %v349 = vadd.f32 %v343, %v347
  %v350 = vtanh.pop %v349
  %v351 = vmul.f32 %v338, %v350
  %353 = vrot.lane.b32.xlu0 %v349, 64
  %v354 = vpop.permute.xlu0 %353
  %356 = vst.msk [vmem:[#allocation5] sm:$0xff] %vm87, %v354
  %358 = vrot.lane.b32.xlu0 %v351, 64
  %v359 = vpop.permute.xlu0 %358
  %361 = vst.msk [vmem:[#allocation4] sm:$0xff] %vm87, %v359
  %s362 = scalar_lea.vmem [#allocation3], 8
  %363 = vst.msk [vmem:[%s362] sm:$0xff] %vm87, %v359
  %v364 = vld [vmem:[#allocation4] sm:$0xff]
  %v365 = vld [vmem:[#allocation5] sm:$0xff]
  %s366 = scalar_lea.vmem [#allocation2], 32
  %v367 = vld [vmem:[%s366] sm:$0xff]
  %v368 = vld [vmem:[%s366 + $0x8] sm:$0xff]
  %v369 = vpack.c.bf16 %v364, %v364
  %v371 = vsel %vm87, %v369, 0
  %373 = vmatpush.bf16.msra.mxu0 0
  %374 = vmatpush.bf16.msra.mxu0 0
  %375 = vmatpush.bf16.msra.mxu0 0
  %376 = vmatpush.bf16.msra.mxu0 0
  %377 = vmatpush.bf16.msra.mxu0 %v219
  %378 = vmatpush.bf16.msra.mxu0 %v217
  %379 = vmatpush.bf16.msra.mxu0 %v215
  %380 = vmatpush.bf16.msra.mxu0 %v213
  %381 = vmatmul.bf16.gmra.mxu0 %v371
  %v382 = vpop.f32.mrf.mxu0
  %v383 = vadd.f32 0.0, %v382
  %v384 = vpop.f32.mrf.mxu0
  %385 = vdwg.mxu0
  %386 = vmatpush.bf16.msra.mxu0 0
  %387 = vmatpush.bf16.msra.mxu0 0
  %388 = vmatpush.bf16.msra.mxu0 0
  %389 = vmatpush.bf16.msra.mxu0 0
  %390 = vmatpush.bf16.msra.mxu0 %v220
  %391 = vmatpush.bf16.msra.mxu0 %v218
  %392 = vmatpush.bf16.msra.mxu0 %v216
  %393 = vmatpush.bf16.msra.mxu0 %v214
  %394 = vmatmul.bf16.gmra.mxu0 %v371
  %v395 = vpop.f32.mrf.mxu0
  %v396 = vadd.f32 0.0, %v395
  %v397 = vpop.f32.mrf.mxu0
  %398 = vdwg.mxu0
  %v399 = vadd.f32 %v367, %v383
  %v400 = vadd.f32 %v368, %v396
  %v401 = vmul.f32 %v399, 0.5
  %v402 = vtanh.pop %v401
  %v403 = vmul.f32 %v402, 0.5
  %v404 = vadd.f32 %v403, 0.5
  %v405 = vtanh.pop %v400
  %v406 = vmul.f32 %v400, 0.5
  %v407 = vtanh.pop %v406
  %v408 = vmul.f32 %v407, 0.5
  %v409 = vadd.f32 %v408, 0.5
  %411 = vrot.lane.b32.xlu0 %v365, 64
  %v412 = vpop.permute.xlu0 %411
  %v414 = vmul.f32 %v404, %v412
  %v415 = vmul.f32 %v404, %v405
  %417 = vrot.lane.b32.xlu0 %v415, 64
  %v418 = vpop.permute.xlu0 %417
  %v420 = vadd.f32 %v414, %v418
  %v421 = vtanh.pop %v420
  %v422 = vmul.f32 %v409, %v421
  %424 = vrot.lane.b32.xlu0 %v420, 64
  %v425 = vpop.permute.xlu0 %424
  %427 = vst.msk [vmem:[#allocation5] sm:$0xff] %vm87, %v425
  %429 = vrot.lane.b32.xlu0 %v422, 64
  %v430 = vpop.permute.xlu0 %429
  %432 = vst.msk [vmem:[#allocation4] sm:$0xff] %vm87, %v430
  %s433 = scalar_lea.vmem [#allocation3], 16
  %434 = vst.msk [vmem:[%s433] sm:$0xff] %vm87, %v430
  %v435 = vld [vmem:[#allocation4] sm:$0xff]
  %v436 = vld [vmem:[#allocation5] sm:$0xff]
  %s437 = scalar_lea.vmem [#allocation2], 48
  %v438 = vld [vmem:[%s437] sm:$0xff]
  %v439 = vld [vmem:[%s437 + $0x8] sm:$0xff]
  %v440 = vpack.c.bf16 %v435, %v435
  %v442 = vsel %vm87, %v440, 0
  %444 = vmatpush.bf16.msra.mxu0 0
  %445 = vmatpush.bf16.msra.mxu0 0
  %446 = vmatpush.bf16.msra.mxu0 0
  %447 = vmatpush.bf16.msra.mxu0 0
  %448 = vmatpush.bf16.msra.mxu0 %v219
  %449 = vmatpush.bf16.msra.mxu0 %v217
  %450 = vmatpush.bf16.msra.mxu0 %v215
  %451 = vmatpush.bf16.msra.mxu0 %v213
  %452 = vmatmul.bf16.gmra.mxu0 %v442
  %v453 = vpop.f32.mrf.mxu0
  %v454 = vadd.f32 0.0, %v453
  %v455 = vpop.f32.mrf.mxu0
  %456 = vdwg.mxu0
  %457 = vmatpush.bf16.msra.mxu0 0
  %458 = vmatpush.bf16.msra.mxu0 0
  %459 = vmatpush.bf16.msra.mxu0 0
  %460 = vmatpush.bf16.msra.mxu0 0
  %461 = vmatpush.bf16.msra.mxu0 %v220
  %462 = vmatpush.bf16.msra.mxu0 %v218
  %463 = vmatpush.bf16.msra.mxu0 %v216
  %464 = vmatpush.bf16.msra.mxu0 %v214
  %465 = vmatmul.bf16.gmra.mxu0 %v442
  %v466 = vpop.f32.mrf.mxu0
  %v467 = vadd.f32 0.0, %v466
  %v468 = vpop.f32.mrf.mxu0
  %469 = vdwg.mxu0
  %v470 = vadd.f32 %v438, %v454
  %v471 = vadd.f32 %v439, %v467
  %v472 = vmul.f32 %v470, 0.5
  %v473 = vtanh.pop %v472
  %v474 = vmul.f32 %v473, 0.5
  %v475 = vadd.f32 %v474, 0.5
  %v476 = vtanh.pop %v471
  %v477 = vmul.f32 %v471, 0.5
  %v478 = vtanh.pop %v477
  %v479 = vmul.f32 %v478, 0.5
  %v480 = vadd.f32 %v479, 0.5
  %482 = vrot.lane.b32.xlu0 %v436, 64
  %v483 = vpop.permute.xlu0 %482
  %v485 = vmul.f32 %v475, %v483
  %v486 = vmul.f32 %v475, %v476
  %488 = vrot.lane.b32.xlu0 %v486, 64
  %v489 = vpop.permute.xlu0 %488
  %v491 = vadd.f32 %v485, %v489
  %v492 = vtanh.pop %v491
  %v493 = vmul.f32 %v480, %v492
  %495 = vrot.lane.b32.xlu0 %v491, 64
  %v496 = vpop.permute.xlu0 %495
  %498 = vst.msk [vmem:[#allocation5] sm:$0xff] %vm87, %v496
  %500 = vrot.lane.b32.xlu0 %v493, 64
  %v501 = vpop.permute.xlu0 %500
  %503 = vst.msk [vmem:[#allocation4] sm:$0xff] %vm87, %v501
  %s504 = scalar_lea.vmem [#allocation3], 24
  %505 = vst.msk [vmem:[%s504] sm:$0xff] %vm87, %v501
  %v506 = vld [vmem:[#allocation4] sm:$0xff]
  %v507 = vld [vmem:[#allocation5] sm:$0xff]
  %s508 = scalar_lea.vmem [#allocation2], 64
  %v509 = vld [vmem:[%s508] sm:$0xff]
  %v510 = vld [vmem:[%s508 + $0x8] sm:$0xff]
  %v511 = vpack.c.bf16 %v506, %v506
  %v513 = vsel %vm87, %v511, 0
  %515 = vmatpush.bf16.msra.mxu0 0
  %516 = vmatpush.bf16.msra.mxu0 0
  %517 = vmatpush.bf16.msra.mxu0 0
  %518 = vmatpush.bf16.msra.mxu0 0
  %519 = vmatpush.bf16.msra.mxu0 %v219
  %520 = vmatpush.bf16.msra.mxu0 %v217
  %521 = vmatpush.bf16.msra.mxu0 %v215
  %522 = vmatpush.bf16.msra.mxu0 %v213
  %523 = vmatmul.bf16.gmra.mxu0 %v513
  %v524 = vpop.f32.mrf.mxu0
  %v525 = vadd.f32 0.0, %v524
  %v526 = vpop.f32.mrf.mxu0
  %527 = vdwg.mxu0
  %528 = vmatpush.bf16.msra.mxu0 0
  %529 = vmatpush.bf16.msra.mxu0 0
  %530 = vmatpush.bf16.msra.mxu0 0
  %531 = vmatpush.bf16.msra.mxu0 0
  %532 = vmatpush.bf16.msra.mxu0 %v220
  %533 = vmatpush.bf16.msra.mxu0 %v218
  %534 = vmatpush.bf16.msra.mxu0 %v216
  %535 = vmatpush.bf16.msra.mxu0 %v214
  %536 = vmatmul.bf16.gmra.mxu0 %v513
  %v537 = vpop.f32.mrf.mxu0
  %v538 = vadd.f32 0.0, %v537
  %v539 = vpop.f32.mrf.mxu0
  %540 = vdwg.mxu0
  %v541 = vadd.f32 %v509, %v525
  %v542 = vadd.f32 %v510, %v538
  %v543 = vmul.f32 %v541, 0.5
  %v544 = vtanh.pop %v543
  %v545 = vmul.f32 %v544, 0.5
  %v546 = vadd.f32 %v545, 0.5
  %v547 = vtanh.pop %v542
  %v548 = vmul.f32 %v542, 0.5
  %v549 = vtanh.pop %v548
  %v550 = vmul.f32 %v549, 0.5
  %v551 = vadd.f32 %v550, 0.5
  %553 = vrot.lane.b32.xlu0 %v507, 64
  %v554 = vpop.permute.xlu0 %553
  %v556 = vmul.f32 %v546, %v554
  %v557 = vmul.f32 %v546, %v547
  %559 = vrot.lane.b32.xlu0 %v557, 64
  %v560 = vpop.permute.xlu0 %559
  %v562 = vadd.f32 %v556, %v560
  %v563 = vtanh.pop %v562
  %v564 = vmul.f32 %v551, %v563
  %566 = vrot.lane.b32.xlu0 %v562, 64
  %v567 = vpop.permute.xlu0 %566
  %569 = vst.msk [vmem:[#allocation5] sm:$0xff] %vm87, %v567
  %571 = vrot.lane.b32.xlu0 %v564, 64
  %v572 = vpop.permute.xlu0 %571
  %574 = vst.msk [vmem:[#allocation4] sm:$0xff] %vm87, %v572
  %s575 = scalar_lea.vmem [#allocation3], 32
  %576 = vst.msk [vmem:[%s575] sm:$0xff] %vm87, %v572
  %v577 = vld [vmem:[#allocation4] sm:$0xff]
  %v578 = vld [vmem:[#allocation5] sm:$0xff]
  %s579 = scalar_lea.vmem [#allocation2], 80
  %v580 = vld [vmem:[%s579] sm:$0xff]
  %v581 = vld [vmem:[%s579 + $0x8] sm:$0xff]
  %v582 = vpack.c.bf16 %v577, %v577
  %v584 = vsel %vm87, %v582, 0
  %586 = vmatpush.bf16.msra.mxu0 0
  %587 = vmatpush.bf16.msra.mxu0 0
  %588 = vmatpush.bf16.msra.mxu0 0
  %589 = vmatpush.bf16.msra.mxu0 0
  %590 = vmatpush.bf16.msra.mxu0 %v219
  %591 = vmatpush.bf16.msra.mxu0 %v217
  %592 = vmatpush.bf16.msra.mxu0 %v215
  %593 = vmatpush.bf16.msra.mxu0 %v213
  %594 = vmatmul.bf16.gmra.mxu0 %v584
  %v595 = vpop.f32.mrf.mxu0
  %v596 = vadd.f32 0.0, %v595
  %v597 = vpop.f32.mrf.mxu0
  %598 = vdwg.mxu0
  %599 = vmatpush.bf16.msra.mxu0 0
  %600 = vmatpush.bf16.msra.mxu0 0
  %601 = vmatpush.bf16.msra.mxu0 0
  %602 = vmatpush.bf16.msra.mxu0 0
  %603 = vmatpush.bf16.msra.mxu0 %v220
  %604 = vmatpush.bf16.msra.mxu0 %v218
  %605 = vmatpush.bf16.msra.mxu0 %v216
  %606 = vmatpush.bf16.msra.mxu0 %v214
  %607 = vmatmul.bf16.gmra.mxu0 %v584
  %v608 = vpop.f32.mrf.mxu0
  %v609 = vadd.f32 0.0, %v608
  %v610 = vpop.f32.mrf.mxu0
  %611 = vdwg.mxu0
  %v612 = vadd.f32 %v580, %v596
  %v613 = vadd.f32 %v581, %v609
  %v614 = vmul.f32 %v612, 0.5
  %v615 = vtanh.pop %v614
  %v616 = vmul.f32 %v615, 0.5
  %v617 = vadd.f32 %v616, 0.5
  %v618 = vtanh.pop %v613
  %v619 = vmul.f32 %v613, 0.5
  %v620 = vtanh.pop %v619
  %v621 = vmul.f32 %v620, 0.5
  %v622 = vadd.f32 %v621, 0.5
  %624 = vrot.lane.b32.xlu0 %v578, 64
  %v625 = vpop.permute.xlu0 %624
  %v627 = vmul.f32 %v617, %v625
  %v628 = vmul.f32 %v617, %v618
  %630 = vrot.lane.b32.xlu0 %v628, 64
  %v631 = vpop.permute.xlu0 %630
  %v633 = vadd.f32 %v627, %v631
  %v634 = vtanh.pop %v633
  %v635 = vmul.f32 %v622, %v634
  %637 = vrot.lane.b32.xlu0 %v633, 64
  %v638 = vpop.permute.xlu0 %637
  %640 = vst.msk [vmem:[#allocation5] sm:$0xff] %vm87, %v638
  %642 = vrot.lane.b32.xlu0 %v635, 64
  %v643 = vpop.permute.xlu0 %642
  %645 = vst.msk [vmem:[#allocation4] sm:$0xff] %vm87, %v643
  %s646 = scalar_lea.vmem [#allocation3], 40
  %647 = vst.msk [vmem:[%s646] sm:$0xff] %vm87, %v643
  %v648 = vld [vmem:[#allocation4] sm:$0xff]
  %v649 = vld [vmem:[#allocation5] sm:$0xff]
  %s650 = scalar_lea.vmem [#allocation2], 96
  %v651 = vld [vmem:[%s650] sm:$0xff]
  %v652 = vld [vmem:[%s650 + $0x8] sm:$0xff]
  %v653 = vpack.c.bf16 %v648, %v648
  %v655 = vsel %vm87, %v653, 0
  %657 = vmatpush.bf16.msra.mxu0 0
  %658 = vmatpush.bf16.msra.mxu0 0
  %659 = vmatpush.bf16.msra.mxu0 0
  %660 = vmatpush.bf16.msra.mxu0 0
  %661 = vmatpush.bf16.msra.mxu0 %v219
  %662 = vmatpush.bf16.msra.mxu0 %v217
  %663 = vmatpush.bf16.msra.mxu0 %v215
  %664 = vmatpush.bf16.msra.mxu0 %v213
  %665 = vmatmul.bf16.gmra.mxu0 %v655
  %v666 = vpop.f32.mrf.mxu0
  %v667 = vadd.f32 0.0, %v666
  %v668 = vpop.f32.mrf.mxu0
  %669 = vdwg.mxu0
  %670 = vmatpush.bf16.msra.mxu0 0
  %671 = vmatpush.bf16.msra.mxu0 0
  %672 = vmatpush.bf16.msra.mxu0 0
  %673 = vmatpush.bf16.msra.mxu0 0
  %674 = vmatpush.bf16.msra.mxu0 %v220
  %675 = vmatpush.bf16.msra.mxu0 %v218
  %676 = vmatpush.bf16.msra.mxu0 %v216
  %677 = vmatpush.bf16.msra.mxu0 %v214
  %678 = vmatmul.bf16.gmra.mxu0 %v655
  %v679 = vpop.f32.mrf.mxu0
  %v680 = vadd.f32 0.0, %v679
  %v681 = vpop.f32.mrf.mxu0
  %682 = vdwg.mxu0
  %v683 = vadd.f32 %v651, %v667
  %v684 = vadd.f32 %v652, %v680
  %v685 = vmul.f32 %v683, 0.5
  %v686 = vtanh.pop %v685
  %v687 = vmul.f32 %v686, 0.5
  %v688 = vadd.f32 %v687, 0.5
  %v689 = vtanh.pop %v684
  %v690 = vmul.f32 %v684, 0.5
  %v691 = vtanh.pop %v690
  %v692 = vmul.f32 %v691, 0.5
  %v693 = vadd.f32 %v692, 0.5
  %695 = vrot.lane.b32.xlu0 %v649, 64
  %v696 = vpop.permute.xlu0 %695
  %v698 = vmul.f32 %v688, %v696
  %v699 = vmul.f32 %v688, %v689
  %701 = vrot.lane.b32.xlu0 %v699, 64
  %v702 = vpop.permute.xlu0 %701
  %v704 = vadd.f32 %v698, %v702
  %v705 = vtanh.pop %v704
  %v706 = vmul.f32 %v693, %v705
  %708 = vrot.lane.b32.xlu0 %v704, 64
  %v709 = vpop.permute.xlu0 %708
  %711 = vst.msk [vmem:[#allocation5] sm:$0xff] %vm87, %v709
  %713 = vrot.lane.b32.xlu0 %v706, 64
  %v714 = vpop.permute.xlu0 %713
  %716 = vst.msk [vmem:[#allocation4] sm:$0xff] %vm87, %v714
  %s717 = scalar_lea.vmem [#allocation3], 48
  %718 = vst.msk [vmem:[%s717] sm:$0xff] %vm87, %v714
  %v719 = vld [vmem:[#allocation4] sm:$0xff]
  %v720 = vld [vmem:[#allocation5] sm:$0xff]
  %s721 = scalar_lea.vmem [#allocation2], 112
  %v722 = vld [vmem:[%s721] sm:$0xff]
  %v723 = vld [vmem:[%s721 + $0x8] sm:$0xff]
  %v724 = vpack.c.bf16 %v719, %v719
  %v726 = vsel %vm87, %v724, 0
  %728 = vmatpush.bf16.msra.mxu0 0
  %729 = vmatpush.bf16.msra.mxu0 0
  %730 = vmatpush.bf16.msra.mxu0 0
  %731 = vmatpush.bf16.msra.mxu0 0
  %732 = vmatpush.bf16.msra.mxu0 %v219
  %733 = vmatpush.bf16.msra.mxu0 %v217
  %734 = vmatpush.bf16.msra.mxu0 %v215
  %735 = vmatpush.bf16.msra.mxu0 %v213
  %736 = vmatmul.bf16.gmra.mxu0 %v726
  %v737 = vpop.f32.mrf.mxu0
  %v738 = vadd.f32 0.0, %v737
  %v739 = vpop.f32.mrf.mxu0
  %740 = vdwg.mxu0
  %741 = vmatpush.bf16.msra.mxu0 0
  %742 = vmatpush.bf16.msra.mxu0 0
  %743 = vmatpush.bf16.msra.mxu0 0
  %744 = vmatpush.bf16.msra.mxu0 0
  %745 = vmatpush.bf16.msra.mxu0 %v220
  %746 = vmatpush.bf16.msra.mxu0 %v218
  %747 = vmatpush.bf16.msra.mxu0 %v216
  %748 = vmatpush.bf16.msra.mxu0 %v214
  %749 = vmatmul.bf16.gmra.mxu0 %v726
  %v750 = vpop.f32.mrf.mxu0
  %v751 = vadd.f32 0.0, %v750
  %v752 = vpop.f32.mrf.mxu0
  %753 = vdwg.mxu0
  %v754 = vadd.f32 %v722, %v738
  %v755 = vadd.f32 %v723, %v751
  %v756 = vmul.f32 %v754, 0.5
  %v757 = vtanh.pop %v756
  %v758 = vmul.f32 %v757, 0.5
  %v759 = vadd.f32 %v758, 0.5
  %v760 = vtanh.pop %v755
  %v761 = vmul.f32 %v755, 0.5
  %v762 = vtanh.pop %v761
  %v763 = vmul.f32 %v762, 0.5
  %v764 = vadd.f32 %v763, 0.5
  %766 = vrot.lane.b32.xlu0 %v720, 64
  %v767 = vpop.permute.xlu0 %766
  %v769 = vmul.f32 %v759, %v767
  %v770 = vmul.f32 %v759, %v760
  %772 = vrot.lane.b32.xlu0 %v770, 64
  %v773 = vpop.permute.xlu0 %772
  %v775 = vadd.f32 %v769, %v773
  %v776 = vtanh.pop %v775
  %v777 = vmul.f32 %v764, %v776
  %779 = vrot.lane.b32.xlu0 %v775, 64
  %v780 = vpop.permute.xlu0 %779
  %782 = vst.msk [vmem:[#allocation5] sm:$0xff] %vm87, %v780
  %784 = vrot.lane.b32.xlu0 %v777, 64
  %v785 = vpop.permute.xlu0 %784
  %787 = vst.msk [vmem:[#allocation4] sm:$0xff] %vm87, %v785
  %s788 = scalar_lea.vmem [#allocation3], 56
  %789 = vst.msk [vmem:[%s788] sm:$0xff] %vm87, %v785
  %v790 = vld [vmem:[#allocation3] sm:$0xff]
  %v791 = vld [vmem:[#allocation3 + $0x8] sm:$0xff]
  %v792 = vld [vmem:[#allocation3 + $0x10] sm:$0xff]
  %v793 = vld [vmem:[#allocation3 + $0x18] sm:$0xff]
  %v794 = vld [vmem:[#allocation3 + $0x20] sm:$0xff]
  %v795 = vld [vmem:[#allocation3 + $0x28] sm:$0xff]
  %v796 = vld [vmem:[#allocation3 + $0x30] sm:$0xff]
  %v797 = vld [vmem:[#allocation3 + $0x38] sm:$0xff]
  %v798 = vrot.slane %v792, 4
  %vm799 = vcmask 1047556
  %v800 = vsel %vm799, %v798, %v790
  %v801 = vrot.slane %v790, 4
  %v802 = vsel %vm799, %v792, %v801
  %v804 = vunpack.c.l.s4 1983009808
  %v805 = vunpack.c.0.s8 %v804
  %v806 = vperm.slane %v800, %v805
  %v808 = vunpack.c.l.s4 1983009808
  %v809 = vunpack.c.0.s8 %v808
  %v810 = vperm.slane %v802, %v809
  %v811 = vrot.slane %v793, 4
  %v812 = vsel %vm799, %v811, %v791
  %v813 = vrot.slane %v791, 4
  %v814 = vsel %vm799, %v793, %v813
  %v816 = vunpack.c.l.s4 1983009808
  %v817 = vunpack.c.0.s8 %v816
  %v818 = vperm.slane %v812, %v817
  %v820 = vunpack.c.l.s4 1983009808
  %v821 = vunpack.c.0.s8 %v820
  %v822 = vperm.slane %v814, %v821
  %v823 = vrot.slane %v796, 4
  %v824 = vsel %vm799, %v823, %v794
  %v825 = vrot.slane %v794, 4
  %v826 = vsel %vm799, %v796, %v825
  %v828 = vunpack.c.l.s4 1983009808
  %v829 = vunpack.c.0.s8 %v828
  %v830 = vperm.slane %v824, %v829
  %v832 = vunpack.c.l.s4 1983009808
  %v833 = vunpack.c.0.s8 %v832
  %v834 = vperm.slane %v826, %v833
  %v835 = vrot.slane %v797, 4
  %v836 = vsel %vm799, %v835, %v795
  %v837 = vrot.slane %v795, 4
  %v838 = vsel %vm799, %v797, %v837
  %v840 = vunpack.c.l.s4 1983009808
  %v841 = vunpack.c.0.s8 %v840
  %v842 = vperm.slane %v836, %v841
  %v844 = vunpack.c.l.s4 1983009808
  %v845 = vunpack.c.0.s8 %v844
  %v846 = vperm.slane %v838, %v845
  %v847 = vrot.slane %v818, 4
  %v848 = vsel %vm799, %v847, %v806
  %v849 = vrot.slane %v806, 4
  %v850 = vsel %vm799, %v818, %v849
  %v852 = vunpack.c.l.s4 1934713408
  %v853 = vunpack.c.0.s8 %v852
  %v854 = vperm.slane %v848, %v853
  %v856 = vunpack.c.l.s4 1934713408
  %v857 = vunpack.c.0.s8 %v856
  %v858 = vperm.slane %v850, %v857
  %v859 = vrot.slane %v822, 4
  %v860 = vsel %vm799, %v859, %v810
  %v861 = vrot.slane %v810, 4
  %v862 = vsel %vm799, %v822, %v861
  %v864 = vunpack.c.l.s4 1934713408
  %v865 = vunpack.c.0.s8 %v864
  %v866 = vperm.slane %v860, %v865
  %v868 = vunpack.c.l.s4 1934713408
  %v869 = vunpack.c.0.s8 %v868
  %v870 = vperm.slane %v862, %v869
  %v871 = vrot.slane %v842, 4
  %v872 = vsel %vm799, %v871, %v830
  %v873 = vrot.slane %v830, 4
  %v874 = vsel %vm799, %v842, %v873
  %v876 = vunpack.c.l.s4 1934713408
  %v877 = vunpack.c.0.s8 %v876
  %v878 = vperm.slane %v872, %v877
  %v880 = vunpack.c.l.s4 1934713408
  %v881 = vunpack.c.0.s8 %v880
  %v882 = vperm.slane %v874, %v881
  %v883 = vrot.slane %v846, 4
  %v884 = vsel %vm799, %v883, %v834
  %v885 = vrot.slane %v834, 4
  %v886 = vsel %vm799, %v846, %v885
  %v888 = vunpack.c.l.s4 1934713408
  %v889 = vunpack.c.0.s8 %v888
  %v890 = vperm.slane %v884, %v889
  %v892 = vunpack.c.l.s4 1934713408
  %v893 = vunpack.c.0.s8 %v892
  %v894 = vperm.slane %v886, %v893
  %v895 = vrot.slane %v878, 4
  %v896 = vsel %vm799, %v895, %v854
  %v897 = vrot.slane %v854, 4
  %v898 = vsel %vm799, %v878, %v897
  %v899 = vrot.slane %v882, 4
  %v900 = vsel %vm799, %v899, %v858
  %v901 = vrot.slane %v858, 4
  %v902 = vsel %vm799, %v882, %v901
  %v903 = vrot.slane %v890, 4
  %v904 = vsel %vm799, %v903, %v866
  %v905 = vrot.slane %v866, 4
  %v906 = vsel %vm799, %v890, %v905
  %v907 = vrot.slane %v894, 4
  %v908 = vsel %vm799, %v907, %v870
  %v909 = vrot.slane %v870, 4
  %v910 = vsel %vm799, %v894, %v909
  %v911 = vld [vmem:[%s4] sm:$0x3f]
  %v912 = vld [vmem:[%s4 + $0x8] sm:$0x3f]
  %v913 = vld [vmem:[%s4 + $0x10] sm:$0x3f]
  %v914 = vld [vmem:[%s4 + $0x18] sm:$0x3f]
  %v915 = vld [vmem:[%s4 + $0x20] sm:$0x3f]
  %v916 = vld [vmem:[%s4 + $0x28] sm:$0x3f]
  %v917 = vld [vmem:[%s4 + $0x30] sm:$0x3f]
  %v918 = vld [vmem:[%s4 + $0x38] sm:$0x3f]
  %v919 = vld [vmem:[%s4 + $0x40] sm:$0x3f]
  %v920 = vld [vmem:[%s4 + $0x48] sm:$0x3f]
  %v921 = vld [vmem:[%s4 + $0x50] sm:$0x3f]
  %v922 = vld [vmem:[%s4 + $0x58] sm:$0x3f]
  %v923 = vld [vmem:[%s4 + $0x60] sm:$0x3f]
  %v924 = vld [vmem:[%s4 + $0x68] sm:$0x3f]
  %v925 = vld [vmem:[%s4 + $0x70] sm:$0x3f]
  %v926 = vld [vmem:[%s4 + $0x78] sm:$0x3f]
  %v927 = vld [vmem:[%s4 + $0x80] sm:$0x3f]
  %v928 = vld [vmem:[%s4 + $0x88] sm:$0x3f]
  %v929 = vld [vmem:[%s4 + $0x90] sm:$0x3f]
  %v930 = vld [vmem:[%s4 + $0x98] sm:$0x3f]
  %v931 = vld [vmem:[%s4 + $0xa0] sm:$0x3f]
  %v932 = vld [vmem:[%s4 + $0xa8] sm:$0x3f]
  %v933 = vld [vmem:[%s4 + $0xb0] sm:$0x3f]
  %v934 = vld [vmem:[%s4 + $0xb8] sm:$0x3f]
  %v935 = vld [vmem:[%s4 + $0xc0] sm:$0x3f]
  %v936 = vld [vmem:[%s4 + $0xc8] sm:$0x3f]
  %v937 = vld [vmem:[%s4 + $0xd0] sm:$0x3f]
  %v938 = vld [vmem:[%s4 + $0xd8] sm:$0x3f]
  %v939 = vld [vmem:[%s4 + $0xe0] sm:$0x3f]
  %v940 = vld [vmem:[%s4 + $0xe8] sm:$0x3f]
  %v941 = vld [vmem:[%s4 + $0xf0] sm:$0x3f]
  %v942 = vld [vmem:[%s4 + $0xf8] sm:$0x3f]
  %vm943 = vcmask 521216
  %v944 = vsel %vm943, %v911, 0.0
  %v945 = vrot.slane %v944, 4
  %v946 = vadd.f32 %v944, %v945
  %v947 = vrot.slane %v946, 2
  %v948 = vadd.f32 %v946, %v947
  %v949 = vrot.slane %v948, 1
  %v950 = vadd.f32 %v948, %v949
  %v951 = vsel %vm943, %v912, 0.0
  %v952 = vrot.slane %v951, 4
  %v953 = vadd.f32 %v951, %v952
  %v954 = vrot.slane %v953, 2
  %v955 = vadd.f32 %v953, %v954
  %v956 = vrot.slane %v955, 1
  %v957 = vadd.f32 %v955, %v956
  %v958 = vsel %vm943, %v913, 0.0
  %v959 = vrot.slane %v958, 4
  %v960 = vadd.f32 %v958, %v959
  %v961 = vrot.slane %v960, 2
  %v962 = vadd.f32 %v960, %v961
  %v963 = vrot.slane %v962, 1
  %v964 = vadd.f32 %v962, %v963
  %v965 = vsel %vm943, %v914, 0.0
  %v966 = vrot.slane %v965, 4
  %v967 = vadd.f32 %v965, %v966
  %v968 = vrot.slane %v967, 2
  %v969 = vadd.f32 %v967, %v968
  %v970 = vrot.slane %v969, 1
  %v971 = vadd.f32 %v969, %v970
  %v972 = vsel %vm943, %v915, 0.0
  %v973 = vrot.slane %v972, 4
  %v974 = vadd.f32 %v972, %v973
  %v975 = vrot.slane %v974, 2
  %v976 = vadd.f32 %v974, %v975
  %v977 = vrot.slane %v976, 1
  %v978 = vadd.f32 %v976, %v977
  %v979 = vsel %vm943, %v916, 0.0
  %v980 = vrot.slane %v979, 4
  %v981 = vadd.f32 %v979, %v980
  %v982 = vrot.slane %v981, 2
  %v983 = vadd.f32 %v981, %v982
  %v984 = vrot.slane %v983, 1
  %v985 = vadd.f32 %v983, %v984
  %v986 = vsel %vm943, %v917, 0.0
  %v987 = vrot.slane %v986, 4
  %v988 = vadd.f32 %v986, %v987
  %v989 = vrot.slane %v988, 2
  %v990 = vadd.f32 %v988, %v989
  %v991 = vrot.slane %v990, 1
  %v992 = vadd.f32 %v990, %v991
  %v993 = vsel %vm943, %v918, 0.0
  %v994 = vrot.slane %v993, 4
  %v995 = vadd.f32 %v993, %v994
  %v996 = vrot.slane %v995, 2
  %v997 = vadd.f32 %v995, %v996
  %v998 = vrot.slane %v997, 1
  %v999 = vadd.f32 %v997, %v998
  %v1000 = vsel %vm943, %v919, 0.0
  %v1001 = vrot.slane %v1000, 4
  %v1002 = vadd.f32 %v1000, %v1001
  %v1003 = vrot.slane %v1002, 2
  %v1004 = vadd.f32 %v1002, %v1003
  %v1005 = vrot.slane %v1004, 1
  %v1006 = vadd.f32 %v1004, %v1005
  %v1007 = vsel %vm943, %v920, 0.0
  %v1008 = vrot.slane %v1007, 4
  %v1009 = vadd.f32 %v1007, %v1008
  %v1010 = vrot.slane %v1009, 2
  %v1011 = vadd.f32 %v1009, %v1010
  %v1012 = vrot.slane %v1011, 1
  %v1013 = vadd.f32 %v1011, %v1012
  %v1014 = vsel %vm943, %v921, 0.0
  %v1015 = vrot.slane %v1014, 4
  %v1016 = vadd.f32 %v1014, %v1015
  %v1017 = vrot.slane %v1016, 2
  %v1018 = vadd.f32 %v1016, %v1017
  %v1019 = vrot.slane %v1018, 1
  %v1020 = vadd.f32 %v1018, %v1019
  %v1021 = vsel %vm943, %v922, 0.0
  %v1022 = vrot.slane %v1021, 4
  %v1023 = vadd.f32 %v1021, %v1022
  %v1024 = vrot.slane %v1023, 2
  %v1025 = vadd.f32 %v1023, %v1024
  %v1026 = vrot.slane %v1025, 1
  %v1027 = vadd.f32 %v1025, %v1026
  %v1028 = vsel %vm943, %v923, 0.0
  %v1029 = vrot.slane %v1028, 4
  %v1030 = vadd.f32 %v1028, %v1029
  %v1031 = vrot.slane %v1030, 2
  %v1032 = vadd.f32 %v1030, %v1031
  %v1033 = vrot.slane %v1032, 1
  %v1034 = vadd.f32 %v1032, %v1033
  %v1035 = vsel %vm943, %v924, 0.0
  %v1036 = vrot.slane %v1035, 4
  %v1037 = vadd.f32 %v1035, %v1036
  %v1038 = vrot.slane %v1037, 2
  %v1039 = vadd.f32 %v1037, %v1038
  %v1040 = vrot.slane %v1039, 1
  %v1041 = vadd.f32 %v1039, %v1040
  %v1042 = vsel %vm943, %v925, 0.0
  %v1043 = vrot.slane %v1042, 4
  %v1044 = vadd.f32 %v1042, %v1043
  %v1045 = vrot.slane %v1044, 2
  %v1046 = vadd.f32 %v1044, %v1045
  %v1047 = vrot.slane %v1046, 1
  %v1048 = vadd.f32 %v1046, %v1047
  %v1049 = vsel %vm943, %v926, 0.0
  %v1050 = vrot.slane %v1049, 4
  %v1051 = vadd.f32 %v1049, %v1050
  %v1052 = vrot.slane %v1051, 2
  %v1053 = vadd.f32 %v1051, %v1052
  %v1054 = vrot.slane %v1053, 1
  %v1055 = vadd.f32 %v1053, %v1054
  %v1056 = vsel %vm943, %v927, 0.0
  %v1057 = vrot.slane %v1056, 4
  %v1058 = vadd.f32 %v1056, %v1057
  %v1059 = vrot.slane %v1058, 2
  %v1060 = vadd.f32 %v1058, %v1059
  %v1061 = vrot.slane %v1060, 1
  %v1062 = vadd.f32 %v1060, %v1061
  %v1063 = vsel %vm943, %v928, 0.0
  %v1064 = vrot.slane %v1063, 4
  %v1065 = vadd.f32 %v1063, %v1064
  %v1066 = vrot.slane %v1065, 2
  %v1067 = vadd.f32 %v1065, %v1066
  %v1068 = vrot.slane %v1067, 1
  %v1069 = vadd.f32 %v1067, %v1068
  %v1070 = vsel %vm943, %v929, 0.0
  %v1071 = vrot.slane %v1070, 4
  %v1072 = vadd.f32 %v1070, %v1071
  %v1073 = vrot.slane %v1072, 2
  %v1074 = vadd.f32 %v1072, %v1073
  %v1075 = vrot.slane %v1074, 1
  %v1076 = vadd.f32 %v1074, %v1075
  %v1077 = vsel %vm943, %v930, 0.0
  %v1078 = vrot.slane %v1077, 4
  %v1079 = vadd.f32 %v1077, %v1078
  %v1080 = vrot.slane %v1079, 2
  %v1081 = vadd.f32 %v1079, %v1080
  %v1082 = vrot.slane %v1081, 1
  %v1083 = vadd.f32 %v1081, %v1082
  %v1084 = vsel %vm943, %v931, 0.0
  %v1085 = vrot.slane %v1084, 4
  %v1086 = vadd.f32 %v1084, %v1085
  %v1087 = vrot.slane %v1086, 2
  %v1088 = vadd.f32 %v1086, %v1087
  %v1089 = vrot.slane %v1088, 1
  %v1090 = vadd.f32 %v1088, %v1089
  %v1091 = vsel %vm943, %v932, 0.0
  %v1092 = vrot.slane %v1091, 4
  %v1093 = vadd.f32 %v1091, %v1092
  %v1094 = vrot.slane %v1093, 2
  %v1095 = vadd.f32 %v1093, %v1094
  %v1096 = vrot.slane %v1095, 1
  %v1097 = vadd.f32 %v1095, %v1096
  %v1098 = vsel %vm943, %v933, 0.0
  %v1099 = vrot.slane %v1098, 4
  %v1100 = vadd.f32 %v1098, %v1099
  %v1101 = vrot.slane %v1100, 2
  %v1102 = vadd.f32 %v1100, %v1101
  %v1103 = vrot.slane %v1102, 1
  %v1104 = vadd.f32 %v1102, %v1103
  %v1105 = vsel %vm943, %v934, 0.0
  %v1106 = vrot.slane %v1105, 4
  %v1107 = vadd.f32 %v1105, %v1106
  %v1108 = vrot.slane %v1107, 2
  %v1109 = vadd.f32 %v1107, %v1108
  %v1110 = vrot.slane %v1109, 1
  %v1111 = vadd.f32 %v1109, %v1110
  %v1112 = vsel %vm943, %v935, 0.0
  %v1113 = vrot.slane %v1112, 4
  %v1114 = vadd.f32 %v1112, %v1113
  %v1115 = vrot.slane %v1114, 2
  %v1116 = vadd.f32 %v1114, %v1115
  %v1117 = vrot.slane %v1116, 1
  %v1118 = vadd.f32 %v1116, %v1117
  %v1119 = vsel %vm943, %v936, 0.0
  %v1120 = vrot.slane %v1119, 4
  %v1121 = vadd.f32 %v1119, %v1120
  %v1122 = vrot.slane %v1121, 2
  %v1123 = vadd.f32 %v1121, %v1122
  %v1124 = vrot.slane %v1123, 1
  %v1125 = vadd.f32 %v1123, %v1124
  %v1126 = vsel %vm943, %v937, 0.0
  %v1127 = vrot.slane %v1126, 4
  %v1128 = vadd.f32 %v1126, %v1127
  %v1129 = vrot.slane %v1128, 2
  %v1130 = vadd.f32 %v1128, %v1129
  %v1131 = vrot.slane %v1130, 1
  %v1132 = vadd.f32 %v1130, %v1131
  %v1133 = vsel %vm943, %v938, 0.0
  %v1134 = vrot.slane %v1133, 4
  %v1135 = vadd.f32 %v1133, %v1134
  %v1136 = vrot.slane %v1135, 2
  %v1137 = vadd.f32 %v1135, %v1136
  %v1138 = vrot.slane %v1137, 1
  %v1139 = vadd.f32 %v1137, %v1138
  %v1140 = vsel %vm943, %v939, 0.0
  %v1141 = vrot.slane %v1140, 4
  %v1142 = vadd.f32 %v1140, %v1141
  %v1143 = vrot.slane %v1142, 2
  %v1144 = vadd.f32 %v1142, %v1143
  %v1145 = vrot.slane %v1144, 1
  %v1146 = vadd.f32 %v1144, %v1145
  %v1147 = vsel %vm943, %v940, 0.0
  %v1148 = vrot.slane %v1147, 4
  %v1149 = vadd.f32 %v1147, %v1148
  %v1150 = vrot.slane %v1149, 2
  %v1151 = vadd.f32 %v1149, %v1150
  %v1152 = vrot.slane %v1151, 1
  %v1153 = vadd.f32 %v1151, %v1152
  %v1154 = vsel %vm943, %v941, 0.0
  %v1155 = vrot.slane %v1154, 4
  %v1156 = vadd.f32 %v1154, %v1155
  %v1157 = vrot.slane %v1156, 2
  %v1158 = vadd.f32 %v1156, %v1157
  %v1159 = vrot.slane %v1158, 1
  %v1160 = vadd.f32 %v1158, %v1159
  %v1161 = vsel %vm943, %v942, 0.0
  %v1162 = vrot.slane %v1161, 4
  %v1163 = vadd.f32 %v1161, %v1162
  %v1164 = vrot.slane %v1163, 2
  %v1165 = vadd.f32 %v1163, %v1164
  %v1166 = vrot.slane %v1165, 1
  %v1167 = vadd.f32 %v1165, %v1166
  %v1168 = vmul.f32 %v950, 0.16666667
  %v1169 = vmul.f32 %v957, 0.16666667
  %v1170 = vmul.f32 %v964, 0.16666667
  %v1171 = vmul.f32 %v971, 0.16666667
  %v1172 = vmul.f32 %v978, 0.16666667
  %v1173 = vmul.f32 %v985, 0.16666667
  %v1174 = vmul.f32 %v992, 0.16666667
  %v1175 = vmul.f32 %v999, 0.16666667
  %v1176 = vmul.f32 %v1006, 0.16666667
  %v1177 = vmul.f32 %v1013, 0.16666667
  %v1178 = vmul.f32 %v1020, 0.16666667
  %v1179 = vmul.f32 %v1027, 0.16666667
  %v1180 = vmul.f32 %v1034, 0.16666667
  %v1181 = vmul.f32 %v1041, 0.16666667
  %v1182 = vmul.f32 %v1048, 0.16666667
  %v1183 = vmul.f32 %v1055, 0.16666667
  %v1184 = vmul.f32 %v1062, 0.16666667
  %v1185 = vmul.f32 %v1069, 0.16666667
  %v1186 = vmul.f32 %v1076, 0.16666667
  %v1187 = vmul.f32 %v1083, 0.16666667
  %v1188 = vmul.f32 %v1090, 0.16666667
  %v1189 = vmul.f32 %v1097, 0.16666667
  %v1190 = vmul.f32 %v1104, 0.16666667
  %v1191 = vmul.f32 %v1111, 0.16666667
  %v1192 = vmul.f32 %v1118, 0.16666667
  %v1193 = vmul.f32 %v1125, 0.16666667
  %v1194 = vmul.f32 %v1132, 0.16666667
  %v1195 = vmul.f32 %v1139, 0.16666667
  %v1196 = vmul.f32 %v1146, 0.16666667
  %v1197 = vmul.f32 %v1153, 0.16666667
  %v1198 = vmul.f32 %v1160, 0.16666667
  %v1199 = vmul.f32 %v1167, 0.16666667
  %v1200 = vpack.c.bf16 %v896, %v896
  %v1201 = vpack.c.bf16 %v898, %v898
  %v1202 = vpack.c.bf16 %v900, %v900
  %v1203 = vpack.c.bf16 %v902, %v902
  %v1204 = vpack.c.bf16 %v904, %v904
  %v1205 = vpack.c.bf16 %v906, %v906
  %v1206 = vpack.c.bf16 %v908, %v908
  %v1207 = vpack.c.bf16 %v910, %v910
  %v1208 = vpack.c.bf16 %v1168, %v1168
  %v1209 = vpack.c.bf16 %v1169, %v1169
  %v1210 = vpack.c.bf16 %v1170, %v1170
  %v1211 = vpack.c.bf16 %v1171, %v1171
  %v1212 = vpack.c.bf16 %v1172, %v1172
  %v1213 = vpack.c.bf16 %v1173, %v1173
  %v1214 = vpack.c.bf16 %v1174, %v1174
  %v1215 = vpack.c.bf16 %v1175, %v1175
  %v1216 = vpack.c.bf16 %v1176, %v1176
  %v1217 = vpack.c.bf16 %v1177, %v1177
  %v1218 = vpack.c.bf16 %v1178, %v1178
  %v1219 = vpack.c.bf16 %v1179, %v1179
  %v1220 = vpack.c.bf16 %v1180, %v1180
  %v1221 = vpack.c.bf16 %v1181, %v1181
  %v1222 = vpack.c.bf16 %v1182, %v1182
  %v1223 = vpack.c.bf16 %v1183, %v1183
  %v1224 = vpack.c.bf16 %v1184, %v1184
  %v1225 = vpack.c.bf16 %v1185, %v1185
  %v1226 = vpack.c.bf16 %v1186, %v1186
  %v1227 = vpack.c.bf16 %v1187, %v1187
  %v1228 = vpack.c.bf16 %v1188, %v1188
  %v1229 = vpack.c.bf16 %v1189, %v1189
  %v1230 = vpack.c.bf16 %v1190, %v1190
  %v1231 = vpack.c.bf16 %v1191, %v1191
  %v1232 = vpack.c.bf16 %v1192, %v1192
  %v1233 = vpack.c.bf16 %v1193, %v1193
  %v1234 = vpack.c.bf16 %v1194, %v1194
  %v1235 = vpack.c.bf16 %v1195, %v1195
  %v1236 = vpack.c.bf16 %v1196, %v1196
  %v1237 = vpack.c.bf16 %v1197, %v1197
  %v1238 = vpack.c.bf16 %v1198, %v1198
  %v1239 = vpack.c.bf16 %v1199, %v1199
  %v1244 = vperm.slane %v1208, 0
  %v1245 = vperm.slane %v1209, 0
  %v1246 = vperm.slane %v1210, 0
  %v1247 = vperm.slane %v1211, 0
  %v1248 = vunpack.c.l.b16 %v1244
  %v1249 = vunpack.c.l.b16 %v1245
  %v1250 = vunpack.c.l.b16 %v1246
  %v1251 = vunpack.c.l.b16 %v1247
  %vm1252 = vcmask 1041409
  %v1253 = vsel %vm1252, %v1249, %v1248
  %vm1254 = vcmask 1042434
  %v1255 = vsel %vm1254, %v1250, %v1253
  %vm1256 = vcmask 1043459
  %v1257 = vsel %vm1256, %v1251, %v1255
  %v1258 = vpack.c.b16 %v1257, %v1257
  %v1260 = vsel %vm87, %v1200, 0
  %v1263 = vsel %vm87, %v1258, 0
  %1265 = vmatpush.bf16.xpose.msra.mxu0 0
  %1266 = vmatpush.bf16.xpose.msra.mxu0 0
  %1267 = vmatpush.bf16.xpose.msra.mxu0 0
  %1268 = vmatpush.bf16.xpose.msra.mxu0 0
  %1269 = vmatpush.bf16.xpose.msra.mxu0 0
  %1270 = vmatpush.bf16.xpose.msra.mxu0 0
  %1271 = vmatpush.bf16.xpose.msra.mxu0 0
  %1272 = vmatpush.bf16.xpose.msra.mxu0 %v1263
  %1273 = vmatmul.bf16.gmra.mxu0 %v1260
  %v1274 = vpop.f32.mrf.mxu0
  %v1275 = vadd.f32 0.0, %v1274
  %v1276 = vpop.f32.mrf.mxu0
  %1277 = vdwg.mxu0
  %v1282 = vperm.slane %v1212, 0
  %v1283 = vperm.slane %v1213, 0
  %v1284 = vperm.slane %v1214, 0
  %v1285 = vperm.slane %v1215, 0
  %v1286 = vunpack.c.l.b16 %v1282
  %v1287 = vunpack.c.l.b16 %v1283
  %v1288 = vunpack.c.l.b16 %v1284
  %v1289 = vunpack.c.l.b16 %v1285
  %v1290 = vsel %vm1252, %v1287, %v1286
  %v1291 = vsel %vm1254, %v1288, %v1290
  %v1292 = vsel %vm1256, %v1289, %v1291
  %v1293 = vpack.c.b16 %v1292, %v1292
  %v1295 = vsel %vm87, %v1201, 0
  %v1298 = vsel %vm87, %v1293, 0
  %1300 = vmatpush.bf16.xpose.msra.mxu0 0
  %1301 = vmatpush.bf16.xpose.msra.mxu0 0
  %1302 = vmatpush.bf16.xpose.msra.mxu0 0
  %1303 = vmatpush.bf16.xpose.msra.mxu0 0
  %1304 = vmatpush.bf16.xpose.msra.mxu0 0
  %1305 = vmatpush.bf16.xpose.msra.mxu0 0
  %1306 = vmatpush.bf16.xpose.msra.mxu0 0
  %1307 = vmatpush.bf16.xpose.msra.mxu0 %v1298
  %1308 = vmatmul.bf16.gmra.mxu0 %v1295
  %v1309 = vpop.f32.mrf.mxu0
  %v1310 = vadd.f32 0.0, %v1309
  %v1311 = vpop.f32.mrf.mxu0
  %1312 = vdwg.mxu0
  %v1317 = vperm.slane %v1216, 0
  %v1318 = vperm.slane %v1217, 0
  %v1319 = vperm.slane %v1218, 0
  %v1320 = vperm.slane %v1219, 0
  %v1321 = vunpack.c.l.b16 %v1317
  %v1322 = vunpack.c.l.b16 %v1318
  %v1323 = vunpack.c.l.b16 %v1319
  %v1324 = vunpack.c.l.b16 %v1320
  %v1325 = vsel %vm1252, %v1322, %v1321
  %v1326 = vsel %vm1254, %v1323, %v1325
  %v1327 = vsel %vm1256, %v1324, %v1326
  %v1328 = vpack.c.b16 %v1327, %v1327
  %v1330 = vsel %vm87, %v1202, 0
  %v1333 = vsel %vm87, %v1328, 0
  %1335 = vmatpush.bf16.xpose.msra.mxu0 0
  %1336 = vmatpush.bf16.xpose.msra.mxu0 0
  %1337 = vmatpush.bf16.xpose.msra.mxu0 0
  %1338 = vmatpush.bf16.xpose.msra.mxu0 0
  %1339 = vmatpush.bf16.xpose.msra.mxu0 0
  %1340 = vmatpush.bf16.xpose.msra.mxu0 0
  %1341 = vmatpush.bf16.xpose.msra.mxu0 0
  %1342 = vmatpush.bf16.xpose.msra.mxu0 %v1333
  %1343 = vmatmul.bf16.gmra.mxu0 %v1330
  %v1344 = vpop.f32.mrf.mxu0
  %v1345 = vadd.f32 0.0, %v1344
  %v1346 = vpop.f32.mrf.mxu0
  %1347 = vdwg.mxu0
  %v1352 = vperm.slane %v1220, 0
  %v1353 = vperm.slane %v1221, 0
  %v1354 = vperm.slane %v1222, 0
  %v1355 = vperm.slane %v1223, 0
  %v1356 = vunpack.c.l.b16 %v1352
  %v1357 = vunpack.c.l.b16 %v1353
  %v1358 = vunpack.c.l.b16 %v1354
  %v1359 = vunpack.c.l.b16 %v1355
  %v1360 = vsel %vm1252, %v1357, %v1356
  %v1361 = vsel %vm1254, %v1358, %v1360
  %v1362 = vsel %vm1256, %v1359, %v1361
  %v1363 = vpack.c.b16 %v1362, %v1362
  %v1365 = vsel %vm87, %v1203, 0
  %v1368 = vsel %vm87, %v1363, 0
  %1370 = vmatpush.bf16.xpose.msra.mxu0 0
  %1371 = vmatpush.bf16.xpose.msra.mxu0 0
  %1372 = vmatpush.bf16.xpose.msra.mxu0 0
  %1373 = vmatpush.bf16.xpose.msra.mxu0 0
  %1374 = vmatpush.bf16.xpose.msra.mxu0 0
  %1375 = vmatpush.bf16.xpose.msra.mxu0 0
  %1376 = vmatpush.bf16.xpose.msra.mxu0 0
  %1377 = vmatpush.bf16.xpose.msra.mxu0 %v1368
  %1378 = vmatmul.bf16.gmra.mxu0 %v1365
  %v1379 = vpop.f32.mrf.mxu0
  %v1380 = vadd.f32 0.0, %v1379
  %v1381 = vpop.f32.mrf.mxu0
  %1382 = vdwg.mxu0
  %v1387 = vperm.slane %v1224, 0
  %v1388 = vperm.slane %v1225, 0
  %v1389 = vperm.slane %v1226, 0
  %v1390 = vperm.slane %v1227, 0
  %v1391 = vunpack.c.l.b16 %v1387
  %v1392 = vunpack.c.l.b16 %v1388
  %v1393 = vunpack.c.l.b16 %v1389
  %v1394 = vunpack.c.l.b16 %v1390
  %v1395 = vsel %vm1252, %v1392, %v1391
  %v1396 = vsel %vm1254, %v1393, %v1395
  %v1397 = vsel %vm1256, %v1394, %v1396
  %v1398 = vpack.c.b16 %v1397, %v1397
  %v1400 = vsel %vm87, %v1204, 0
  %v1403 = vsel %vm87, %v1398, 0
  %1405 = vmatpush.bf16.xpose.msra.mxu0 0
  %1406 = vmatpush.bf16.xpose.msra.mxu0 0
  %1407 = vmatpush.bf16.xpose.msra.mxu0 0
  %1408 = vmatpush.bf16.xpose.msra.mxu0 0
  %1409 = vmatpush.bf16.xpose.msra.mxu0 0
  %1410 = vmatpush.bf16.xpose.msra.mxu0 0
  %1411 = vmatpush.bf16.xpose.msra.mxu0 0
  %1412 = vmatpush.bf16.xpose.msra.mxu0 %v1403
  %1413 = vmatmul.bf16.gmra.mxu0 %v1400
  %v1414 = vpop.f32.mrf.mxu0
  %v1415 = vadd.f32 0.0, %v1414
  %v1416 = vpop.f32.mrf.mxu0
  %1417 = vdwg.mxu0
  %v1422 = vperm.slane %v1228, 0
  %v1423 = vperm.slane %v1229, 0
  %v1424 = vperm.slane %v1230, 0
  %v1425 = vperm.slane %v1231, 0
  %v1426 = vunpack.c.l.b16 %v1422
  %v1427 = vunpack.c.l.b16 %v1423
  %v1428 = vunpack.c.l.b16 %v1424
  %v1429 = vunpack.c.l.b16 %v1425
  %v1430 = vsel %vm1252, %v1427, %v1426
  %v1431 = vsel %vm1254, %v1428, %v1430
  %v1432 = vsel %vm1256, %v1429, %v1431
  %v1433 = vpack.c.b16 %v1432, %v1432
  %v1435 = vsel %vm87, %v1205, 0
  %v1438 = vsel %vm87, %v1433, 0
  %1440 = vmatpush.bf16.xpose.msra.mxu0 0
  %1441 = vmatpush.bf16.xpose.msra.mxu0 0
  %1442 = vmatpush.bf16.xpose.msra.mxu0 0
  %1443 = vmatpush.bf16.xpose.msra.mxu0 0
  %1444 = vmatpush.bf16.xpose.msra.mxu0 0
  %1445 = vmatpush.bf16.xpose.msra.mxu0 0
  %1446 = vmatpush.bf16.xpose.msra.mxu0 0
  %1447 = vmatpush.bf16.xpose.msra.mxu0 %v1438
  %1448 = vmatmul.bf16.gmra.mxu0 %v1435
  %v1449 = vpop.f32.mrf.mxu0
  %v1450 = vadd.f32 0.0, %v1449
  %v1451 = vpop.f32.mrf.mxu0
  %1452 = vdwg.mxu0
  %v1457 = vperm.slane %v1232, 0
  %v1458 = vperm.slane %v1233, 0
  %v1459 = vperm.slane %v1234, 0
  %v1460 = vperm.slane %v1235, 0
  %v1461 = vunpack.c.l.b16 %v1457
  %v1462 = vunpack.c.l.b16 %v1458
  %v1463 = vunpack.c.l.b16 %v1459
  %v1464 = vunpack.c.l.b16 %v1460
  %v1465 = vsel %vm1252, %v1462, %v1461
  %v1466 = vsel %vm1254, %v1463, %v1465
  %v1467 = vsel %vm1256, %v1464, %v1466
  %v1468 = vpack.c.b16 %v1467, %v1467
  %v1470 = vsel %vm87, %v1206, 0
  %v1473 = vsel %vm87, %v1468, 0
  %1475 = vmatpush.bf16.xpose.msra.mxu0 0
  %1476 = vmatpush.bf16.xpose.msra.mxu0 0
  %1477 = vmatpush.bf16.xpose.msra.mxu0 0
  %1478 = vmatpush.bf16.xpose.msra.mxu0 0
  %1479 = vmatpush.bf16.xpose.msra.mxu0 0
  %1480 = vmatpush.bf16.xpose.msra.mxu0 0
  %1481 = vmatpush.bf16.xpose.msra.mxu0 0
  %1482 = vmatpush.bf16.xpose.msra.mxu0 %v1473
  %1483 = vmatmul.bf16.gmra.mxu0 %v1470
  %v1484 = vpop.f32.mrf.mxu0
  %v1485 = vadd.f32 0.0, %v1484
  %v1486 = vpop.f32.mrf.mxu0
  %1487 = vdwg.mxu0
  %v1492 = vperm.slane %v1236, 0
  %v1493 = vperm.slane %v1237, 0
  %v1494 = vperm.slane %v1238, 0
  %v1495 = vperm.slane %v1239, 0
  %v1496 = vunpack.c.l.b16 %v1492
  %v1497 = vunpack.c.l.b16 %v1493
  %v1498 = vunpack.c.l.b16 %v1494
  %v1499 = vunpack.c.l.b16 %v1495
  %v1500 = vsel %vm1252, %v1497, %v1496
  %v1501 = vsel %vm1254, %v1498, %v1500
  %v1502 = vsel %vm1256, %v1499, %v1501
  %v1503 = vpack.c.b16 %v1502, %v1502
  %v1505 = vsel %vm87, %v1207, 0
  %v1508 = vsel %vm87, %v1503, 0
  %1510 = vmatpush.bf16.xpose.msra.mxu0 0
  %1511 = vmatpush.bf16.xpose.msra.mxu0 0
  %1512 = vmatpush.bf16.xpose.msra.mxu0 0
  %1513 = vmatpush.bf16.xpose.msra.mxu0 0
  %1514 = vmatpush.bf16.xpose.msra.mxu0 0
  %1515 = vmatpush.bf16.xpose.msra.mxu0 0
  %1516 = vmatpush.bf16.xpose.msra.mxu0 0
  %1517 = vmatpush.bf16.xpose.msra.mxu0 %v1508
  %1518 = vmatmul.bf16.gmra.mxu0 %v1505
  %v1519 = vpop.f32.mrf.mxu0
  %v1520 = vadd.f32 0.0, %v1519
  %v1521 = vpop.f32.mrf.mxu0
  %1522 = vdwg.mxu0
  %vm1523 = vcmask 31744
  %v1524 = vsel %vm1523, %v1275, -inf
  %1525 = vmax.xlane.f32.xlu0 %v1524
  %v1526 = vpop.xlane.xlu0 %1525
  %v1527 = vsel %vm1523, %v1310, -inf
  %1528 = vmax.xlane.f32.xlu0 %v1527
  %v1529 = vpop.xlane.xlu0 %1528
  %v1530 = vsel %vm1523, %v1345, -inf
  %1531 = vmax.xlane.f32.xlu0 %v1530
  %v1532 = vpop.xlane.xlu0 %1531
  %v1533 = vsel %vm1523, %v1380, -inf
  %1534 = vmax.xlane.f32.xlu0 %v1533
  %v1535 = vpop.xlane.xlu0 %1534
  %v1536 = vsel %vm1523, %v1415, -inf
  %1537 = vmax.xlane.f32.xlu0 %v1536
  %v1538 = vpop.xlane.xlu0 %1537
  %v1539 = vsel %vm1523, %v1450, -inf
  %1540 = vmax.xlane.f32.xlu0 %v1539
  %v1541 = vpop.xlane.xlu0 %1540
  %v1542 = vsel %vm1523, %v1485, -inf
  %1543 = vmax.xlane.f32.xlu0 %v1542
  %v1544 = vpop.xlane.xlu0 %1543
  %v1545 = vsel %vm1523, %v1520, -inf
  %1546 = vmax.xlane.f32.xlu0 %v1545
  %v1547 = vpop.xlane.xlu0 %1546
  %v1548 = vsub.f32 %v1275, %v1526
  %v1549 = vsub.f32 %v1310, %v1529
  %v1550 = vsub.f32 %v1345, %v1532
  %v1551 = vsub.f32 %v1380, %v1535
  %v1552 = vsub.f32 %v1415, %v1538
  %v1553 = vsub.f32 %v1450, %v1541
  %v1554 = vsub.f32 %v1485, %v1544
  %v1555 = vsub.f32 %v1520, %v1547
  %v1556 = vmul.f32 %v1548, 1.442695
  %v1557 = vpow.pop %v1556
  %v1558 = vmul.f32 %v1549, 1.442695
  %v1559 = vpow.pop %v1558
  %v1560 = vmul.f32 %v1550, 1.442695
  %v1561 = vpow.pop %v1560
  %v1562 = vmul.f32 %v1551, 1.442695
  %v1563 = vpow.pop %v1562
  %v1564 = vmul.f32 %v1552, 1.442695
  %v1565 = vpow.pop %v1564
  %v1566 = vmul.f32 %v1553, 1.442695
  %v1567 = vpow.pop %v1566
  %v1568 = vmul.f32 %v1554, 1.442695
  %v1569 = vpow.pop %v1568
  %v1570 = vmul.f32 %v1555, 1.442695
  %v1571 = vpow.pop %v1570
  %v1572 = vsel %vm1523, %v1557, 0.0
  %1573 = vadd.xlane.f32.xlu0 %v1572
  %v1574 = vpop.xlane.xlu0 %1573
  %v1575 = vsel %vm1523, %v1559, 0.0
  %1576 = vadd.xlane.f32.xlu0 %v1575
  %v1577 = vpop.xlane.xlu0 %1576
  %v1578 = vsel %vm1523, %v1561, 0.0
  %1579 = vadd.xlane.f32.xlu0 %v1578
  %v1580 = vpop.xlane.xlu0 %1579
  %v1581 = vsel %vm1523, %v1563, 0.0
  %1582 = vadd.xlane.f32.xlu0 %v1581
  %v1583 = vpop.xlane.xlu0 %1582
  %v1584 = vsel %vm1523, %v1565, 0.0
  %1585 = vadd.xlane.f32.xlu0 %v1584
  %v1586 = vpop.xlane.xlu0 %1585
  %v1587 = vsel %vm1523, %v1567, 0.0
  %1588 = vadd.xlane.f32.xlu0 %v1587
  %v1589 = vpop.xlane.xlu0 %1588
  %v1590 = vsel %vm1523, %v1569, 0.0
  %1591 = vadd.xlane.f32.xlu0 %v1590
  %v1592 = vpop.xlane.xlu0 %1591
  %v1593 = vsel %vm1523, %v1571, 0.0
  %1594 = vadd.xlane.f32.xlu0 %v1593
  %v1595 = vpop.xlane.xlu0 %1594
  %v1596 = vrcp.pop %v1574
  %v1597 = vrcp.pop %v1577
  %v1598 = vrcp.pop %v1580
  %v1599 = vrcp.pop %v1583
  %v1600 = vrcp.pop %v1586
  %v1601 = vrcp.pop %v1589
  %v1602 = vrcp.pop %v1592
  %v1603 = vrcp.pop %v1595
  %v1604 = vmul.f32 %v1557, %v1596
  %v1605 = vmul.f32 %v1559, %v1597
  %v1606 = vmul.f32 %v1561, %v1598
  %v1607 = vmul.f32 %v1563, %v1599
  %v1608 = vmul.f32 %v1565, %v1600
  %v1609 = vmul.f32 %v1567, %v1601
  %v1610 = vmul.f32 %v1569, %v1602
  %v1611 = vmul.f32 %v1571, %v1603
  %v1612 = vpack.c.bf16 %v1604, %v1604
  %v1613 = vpack.c.bf16 %v1605, %v1605
  %v1614 = vpack.c.bf16 %v1606, %v1606
  %v1615 = vpack.c.bf16 %v1607, %v1607
  %v1616 = vpack.c.bf16 %v1608, %v1608
  %v1617 = vpack.c.bf16 %v1609, %v1609
  %v1618 = vpack.c.bf16 %v1610, %v1610
  %v1619 = vpack.c.bf16 %v1611, %v1611
  %v1621 = vsel %vm1523, %v1612, 0
  %vm1623 = vcmask 1041408
  %v1624 = vsel %vm1623, %v1258, 0
  %1626 = vmatpush.bf16.msra.mxu0 0
  %1627 = vmatpush.bf16.msra.mxu0 0
  %1628 = vmatpush.bf16.msra.mxu0 0
  %1629 = vmatpush.bf16.msra.mxu0 0
  %1630 = vmatpush.bf16.msra.mxu0 0
  %1631 = vmatpush.bf16.msra.mxu0 0
  %1632 = vmatpush.bf16.msra.mxu0 0
  %1633 = vmatpush.bf16.msra.mxu0 %v1624
  %1634 = vmatmul.bf16.gmra.mxu0 %v1621
  %v1635 = vpop.f32.mrf.mxu0
  %v1636 = vadd.f32 0.0, %v1635
  %v1637 = vpop.f32.mrf.mxu0
  %1638 = vdwg.mxu0
  %v1640 = vsel %vm1523, %v1613, 0
  %v1642 = vsel %vm1623, %v1293, 0
  %1644 = vmatpush.bf16.msra.mxu0 0
  %1645 = vmatpush.bf16.msra.mxu0 0
  %1646 = vmatpush.bf16.msra.mxu0 0
  %1647 = vmatpush.bf16.msra.mxu0 0
  %1648 = vmatpush.bf16.msra.mxu0 0
  %1649 = vmatpush.bf16.msra.mxu0 0
  %1650 = vmatpush.bf16.msra.mxu0 0
  %1651 = vmatpush.bf16.msra.mxu0 %v1642
  %1652 = vmatmul.bf16.gmra.mxu0 %v1640
  %v1653 = vpop.f32.mrf.mxu0
  %v1654 = vadd.f32 0.0, %v1653
  %v1655 = vpop.f32.mrf.mxu0
  %1656 = vdwg.mxu0
  %v1658 = vsel %vm1523, %v1614, 0
  %v1660 = vsel %vm1623, %v1328, 0
  %1662 = vmatpush.bf16.msra.mxu0 0
  %1663 = vmatpush.bf16.msra.mxu0 0
  %1664 = vmatpush.bf16.msra.mxu0 0
  %1665 = vmatpush.bf16.msra.mxu0 0
  %1666 = vmatpush.bf16.msra.mxu0 0
  %1667 = vmatpush.bf16.msra.mxu0 0
  %1668 = vmatpush.bf16.msra.mxu0 0
  %1669 = vmatpush.bf16.msra.mxu0 %v1660
  %1670 = vmatmul.bf16.gmra.mxu0 %v1658
  %v1671 = vpop.f32.mrf.mxu0
  %v1672 = vadd.f32 0.0, %v1671
  %v1673 = vpop.f32.mrf.mxu0
  %1674 = vdwg.mxu0
  %v1676 = vsel %vm1523, %v1615, 0
  %v1678 = vsel %vm1623, %v1363, 0
  %1680 = vmatpush.bf16.msra.mxu0 0
  %1681 = vmatpush.bf16.msra.mxu0 0
  %1682 = vmatpush.bf16.msra.mxu0 0
  %1683 = vmatpush.bf16.msra.mxu0 0
  %1684 = vmatpush.bf16.msra.mxu0 0
  %1685 = vmatpush.bf16.msra.mxu0 0
  %1686 = vmatpush.bf16.msra.mxu0 0
  %1687 = vmatpush.bf16.msra.mxu0 %v1678
  %1688 = vmatmul.bf16.gmra.mxu0 %v1676
  %v1689 = vpop.f32.mrf.mxu0
  %v1690 = vadd.f32 0.0, %v1689
  %v1691 = vpop.f32.mrf.mxu0
  %1692 = vdwg.mxu0
  %v1694 = vsel %vm1523, %v1616, 0
  %v1696 = vsel %vm1623, %v1398, 0
  %1698 = vmatpush.bf16.msra.mxu0 0
  %1699 = vmatpush.bf16.msra.mxu0 0
  %1700 = vmatpush.bf16.msra.mxu0 0
  %1701 = vmatpush.bf16.msra.mxu0 0
  %1702 = vmatpush.bf16.msra.mxu0 0
  %1703 = vmatpush.bf16.msra.mxu0 0
  %1704 = vmatpush.bf16.msra.mxu0 0
  %1705 = vmatpush.bf16.msra.mxu0 %v1696
  %1706 = vmatmul.bf16.gmra.mxu0 %v1694
  %v1707 = vpop.f32.mrf.mxu0
  %v1708 = vadd.f32 0.0, %v1707
  %v1709 = vpop.f32.mrf.mxu0
  %1710 = vdwg.mxu0
  %v1712 = vsel %vm1523, %v1617, 0
  %v1714 = vsel %vm1623, %v1433, 0
  %1716 = vmatpush.bf16.msra.mxu0 0
  %1717 = vmatpush.bf16.msra.mxu0 0
  %1718 = vmatpush.bf16.msra.mxu0 0
  %1719 = vmatpush.bf16.msra.mxu0 0
  %1720 = vmatpush.bf16.msra.mxu0 0
  %1721 = vmatpush.bf16.msra.mxu0 0
  %1722 = vmatpush.bf16.msra.mxu0 0
  %1723 = vmatpush.bf16.msra.mxu0 %v1714
  %1724 = vmatmul.bf16.gmra.mxu0 %v1712
  %v1725 = vpop.f32.mrf.mxu0
  %v1726 = vadd.f32 0.0, %v1725
  %v1727 = vpop.f32.mrf.mxu0
  %1728 = vdwg.mxu0
  %v1730 = vsel %vm1523, %v1618, 0
  %v1732 = vsel %vm1623, %v1468, 0
  %1734 = vmatpush.bf16.msra.mxu0 0
  %1735 = vmatpush.bf16.msra.mxu0 0
  %1736 = vmatpush.bf16.msra.mxu0 0
  %1737 = vmatpush.bf16.msra.mxu0 0
  %1738 = vmatpush.bf16.msra.mxu0 0
  %1739 = vmatpush.bf16.msra.mxu0 0
  %1740 = vmatpush.bf16.msra.mxu0 0
  %1741 = vmatpush.bf16.msra.mxu0 %v1732
  %1742 = vmatmul.bf16.gmra.mxu0 %v1730
  %v1743 = vpop.f32.mrf.mxu0
  %v1744 = vadd.f32 0.0, %v1743
  %v1745 = vpop.f32.mrf.mxu0
  %1746 = vdwg.mxu0
  %v1748 = vsel %vm1523, %v1619, 0
  %v1750 = vsel %vm1623, %v1503, 0
  %1752 = vmatpush.bf16.msra.mxu0 0
  %1753 = vmatpush.bf16.msra.mxu0 0
  %1754 = vmatpush.bf16.msra.mxu0 0
  %1755 = vmatpush.bf16.msra.mxu0 0
  %1756 = vmatpush.bf16.msra.mxu0 0
  %1757 = vmatpush.bf16.msra.mxu0 0
  %1758 = vmatpush.bf16.msra.mxu0 0
  %1759 = vmatpush.bf16.msra.mxu0 %v1750
  %1760 = vmatmul.bf16.gmra.mxu0 %v1748
  %v1761 = vpop.f32.mrf.mxu0
  %v1762 = vadd.f32 0.0, %v1761
  %v1763 = vpop.f32.mrf.mxu0
  %1764 = vdwg.mxu0
  %1773 = vrot.lane.b32.xlu0 %v1636, 64
  %v1774 = vpop.permute.xlu0 %1773
  %1775 = vrot.lane.b32.xlu0 %v1654, 64
  %v1776 = vpop.permute.xlu0 %1775
  %1777 = vrot.lane.b32.xlu0 %v1672, 64
  %v1778 = vpop.permute.xlu0 %1777
  %1779 = vrot.lane.b32.xlu0 %v1690, 64
  %v1780 = vpop.permute.xlu0 %1779
  %1781 = vrot.lane.b32.xlu0 %v1708, 64
  %v1782 = vpop.permute.xlu0 %1781
  %1783 = vrot.lane.b32.xlu0 %v1726, 64
  %v1784 = vpop.permute.xlu0 %1783
  %1785 = vrot.lane.b32.xlu0 %v1744, 64
  %v1786 = vpop.permute.xlu0 %1785
  %1787 = vrot.lane.b32.xlu0 %v1762, 64
  %v1788 = vpop.permute.xlu0 %1787
  %v1797 = vsel %vm87, %v896, %v1774
  %v1798 = vsel %vm87, %v898, %v1776
  %v1799 = vsel %vm87, %v900, %v1778
  %v1800 = vsel %vm87, %v902, %v1780
  %v1801 = vsel %vm87, %v904, %v1782
  %v1802 = vsel %vm87, %v906, %v1784
  %v1803 = vsel %vm87, %v908, %v1786
  %v1804 = vsel %vm87, %v910, %v1788
  %1805 = vst [vmem:[%s5] sm:$0xff] %v1797
  %1806 = vst [vmem:[%s5 + $0x8] sm:$0xff] %v1798
  %1807 = vst [vmem:[%s5 + $0x10] sm:$0xff] %v1799
  %1808 = vst [vmem:[%s5 + $0x18] sm:$0xff] %v1800
  %1809 = vst [vmem:[%s5 + $0x20] sm:$0xff] %v1801
  %1810 = vst [vmem:[%s5 + $0x28] sm:$0xff] %v1802
  %1811 = vst [vmem:[%s5 + $0x30] sm:$0xff] %v1803
  %1812 = vst [vmem:[%s5 + $0x38] sm:$0xff] %v1804
  // Predicated region
  $region22: #{lstm2seq_attn_context_forward.1} parent=0 // pred_check
    _
  $region23: #{lstm2seq_attn_context_forward.1} parent=0 // pred_check_branch
    %1814 = sbr.rel (0) target = $region25
  $region24: #{lstm2seq_attn_context_forward.1} parent=0 // pred_region
    _
  $region25: #{lstm2seq_attn_context_forward.1} parent=0 // pred_fallthru
    _
  // Predicated region
  $region26: #{lstm2seq_attn_context_forward.1} parent=0 // pred_check
    _
  $region27: #{lstm2seq_attn_context_forward.1} parent=0 // pred_check_branch
    %1816 = sbr.rel (0) target = $region29
  $region28: #{lstm2seq_attn_context_forward.1} parent=0 // pred_region
    _
  $region29: #{lstm2seq_attn_context_forward.1} parent=0 // pred_fallthru
    _

</llo_original>
